<compile_context>
chip_gen: v5e
topology: v5e:2x2
jax: 0.10.0
libtpu: 0.0.40
codegen_flags: <defaults>
</compile_context>

<pallas_src>
import functools
import math

import jax
import jax.numpy as jnp
from jax.experimental import pallas as pl
from jax.experimental.pallas import tpu as pltpu  # noqa: F401  (no grid/scratch needed at this size)


_BLOCK_PARAM_NAMES = ("ln1g", "ln1b", "wq", "bq", "wk", "bk", "wv", "bv",
                      "wo", "bo", "ln2g", "ln2b", "w1", "b1", "w2", "b2")

# MXU operand dtype (f32 accumulation). bf16 per the perf review; flip to jnp.float32
# if exact-f32 matmuls are required.
_MM_DTYPE = jnp.bfloat16
_CLS_PAD = 128          # lane-dense classifier output width


# ---------------------------------------------------------------------------
# Fused Pallas kernel: 2x TransformerBlock + ClassificationLayer, one grid point
# ---------------------------------------------------------------------------

def fused_transformer_kernel(x_ref, mask_ref, *refs, d_model: int):
    blk1_refs = refs[0:16]
    blk2_refs = refs[16:32]
    clsw_ref, clsb_ref = refs[32], refs[33]
    attn1_ref, attn2_ref, logits_ref = refs[34], refs[35], refs[36]

    eps = 1e-5
    inv_sqrt_d = 1.0 / math.sqrt(d_model)
    big_mask = mask_ref[...]            # (B*S, B*S) block-diagonal key-padding mask

    def layernorm(v, g, b):
        mu = jnp.mean(v, axis=-1, keepdims=True)
        var = jnp.mean((v - mu) ** 2, axis=-1, keepdims=True)
        return (v - mu) * jax.lax.rsqrt(var + eps) * g + b

    def mm(a, w, b):                    # bf16 operands on the MXU, f32 accumulation
        return jnp.dot(a.astype(_MM_DTYPE), w.astype(_MM_DTYPE),
                       preferred_element_type=jnp.float32) + b

    def transformer_block(x, p):
        (ln1g, ln1b, wq, bq, wk, bk, wv, bv, wo, bo,
         ln2g, ln2b, w1, b1, w2, b2) = [r[...] for r in p]

        # LayerNorm 1 -> single-head attention
        xn = layernorm(x, ln1g, ln1b)
        q = mm(xn, wq, bq)
        k = mm(xn, wk, bk)
        v = mm(xn, wv, bv)
        # q @ k^T without materializing the transpose: contract last dims on the MXU.
        scores = jax.lax.dot_general(
            q.astype(_MM_DTYPE), k.astype(_MM_DTYPE),
            (((1,), (1,)), ((), ())),
            preferred_element_type=jnp.float32) * inv_sqrt_d
        scores = jnp.where(big_mask == 0.0, -1e9, scores)
        scores = scores - jnp.max(scores, axis=-1, keepdims=True)
        e = jnp.exp(scores)
        attn = e * pl.reciprocal(jnp.sum(e, axis=-1, keepdims=True), approx=True)
        attn_value = jnp.dot(attn.astype(_MM_DTYPE), v.astype(_MM_DTYPE),
                             preferred_element_type=jnp.float32)
        attn_out = mm(attn_value, wo, bo)
        y = attn_out + attn_out         # residual (eval-mode dropout == identity)

        # LayerNorm 2 -> feed-forward
        yn = layernorm(y, ln2g, ln2b)
        h = jnp.maximum(mm(yn, w1, b1), 0.0)
        ff = mm(h, w2, b2)
        z = ff + ff                     # residual (eval-mode dropout == identity)
        return z, attn_value

    x = x_ref[...]                                         # (B*S, D) f32
    z1, av1 = transformer_block(x, blk1_refs)
    attn1_ref[...] = av1
    z2, av2 = transformer_block(z1, blk2_refs)
    attn2_ref[...] = av2
    # Lane-dense classifier: project every row against the 128-col padded weights;
    # the wrapper selects the CLS rows and the first d_output columns.
    logits_ref[...] = mm(z2, clsw_ref[...], clsb_ref[...])


# ---------------------------------------------------------------------------
# Wrapper (single jit, single pallas_call)
# ---------------------------------------------------------------------------

def _as_row(v):
    return v if v.ndim == 2 else v.reshape(1, -1)


@functools.partial(jax.jit, static_argnames=("d_model", "d_output"))
def transformer_classification_forward(tokens, mask, params, *, d_model, d_output):
    """tokens: (B, S) int32, mask: (B, S) f32 of {0,1}."""
    B, S = tokens.shape
    D = d_model

    # WordEmbedder + PositionalEncoder glue (XLA), fed straight into the fused kernel.
    x = jnp.take(params["embed_vec"], tokens, axis=0)          # (B, S, D)
    x = math.sqrt(d_model) * x + params["pe"][None, :S, :]
    x2d = x.reshape(B * S, D)

    # Block-diagonal key-padding mask so batch can live on the sublane axis:
    # big_mask[b*S+i, b2*S+j] = (b == b2) * mask[b2, j]; cross-batch keys masked out,
    # making the folded (B*S, B*S) attention exactly equal to per-batch attention.
    keymask = jnp.broadcast_to(mask[None, None, :, :], (B, S, B, S))
    same_b = jnp.broadcast_to(
        jnp.eye(B, dtype=mask.dtype)[:, None, :, None], (B, S, B, S))
    big_mask = (keymask * same_b).reshape(B * S, B * S)

    blk1 = [_as_row(params["block1"][n]) for n in _BLOCK_PARAM_NAMES]
    blk2 = [_as_row(params["block2"][n]) for n in _BLOCK_PARAM_NAMES]

    # Lane-dense classifier weights: pad (D, d_output) -> (D, 128), bias -> (1, 128).
    cls_w = jnp.zeros((D, _CLS_PAD), jnp.float32).at[:, :d_output].set(params["cls_w"])
    cls_b = jnp.zeros((1, _CLS_PAD), jnp.float32).at[0, :d_output].set(params["cls_b"])

    kernel = functools.partial(fused_transformer_kernel, d_model=d_model)
    attn1, attn2, logits_full = pl.pallas_call(
        kernel,
        out_shape=(jax.ShapeDtypeStruct((B * S, D), jnp.float32),
                   jax.ShapeDtypeStruct((B * S, D), jnp.float32),
                   jax.ShapeDtypeStruct((B * S, _CLS_PAD), jnp.float32)),
    )(x2d, big_mask, *blk1, *blk2, cls_w, cls_b)

    y = logits_full.reshape(B, S, _CLS_PAD)[:, 0, :d_output]   # CLS-token logits
    return y, attn1.reshape(B, S, D), attn2.reshape(B, S, D)


# ---------------------------------------------------------------------------
# Parameter construction + pure-JAX (f32) reference
# ---------------------------------------------------------------------------

def _linear(key, d_in, d_out, w_std=0.02, b_std=0.02):
    kw, kb = jax.random.split(key)
    w = (jax.random.normal(kw, (d_in, d_out)) * w_std).astype(jnp.float32)
    b = (jax.random.normal(kb, (d_out,)) * b_std).astype(jnp.float32)
    return w, b


def _block_params(key, d_model, d_ff):
    ks = jax.random.split(key, 6)
    p = {"ln1g": jnp.ones((d_model,), jnp.float32),
         "ln1b": jnp.zeros((d_model,), jnp.float32),
         "ln2g": jnp.ones((d_model,), jnp.float32),
         "ln2b": jnp.zeros((d_model,), jnp.float32)}
    p["wq"], p["bq"] = _linear(ks[0], d_model, d_model)
    p["wk"], p["bk"] = _linear(ks[1], d_model, d_model)
    p["wv"], p["bv"] = _linear(ks[2], d_model, d_model)
    p["wo"], p["bo"] = _linear(ks[3], d_model, d_model)
    p["w1"], p["b1"] = _linear(ks[4], d_model, d_ff)
    p["w2"], p["b2"] = _linear(ks[5], d_ff, d_model)
    return p


def _positional_encoding(max_seq_len, d_model):
    pos = jnp.arange(max_seq_len, dtype=jnp.float32)[:, None]           # (L, 1)
    i = jnp.arange(0, d_model, 2, dtype=jnp.float32)[None, :]           # (1, D/2)
    div = jnp.power(10000.0, (2.0 * i) / d_model)
    pe = jnp.zeros((max_seq_len, d_model), jnp.float32)
    pe = pe.at[:, 0::2].set(jnp.sin(pos / div))
    pe = pe.at[:, 1::2].set(jnp.cos(pos / div))
    return pe


def _ref_block(x, mask, p, d_model):
    def ln(v, g, b):
        mu = v.mean(-1, keepdims=True)
        var = ((v - mu) ** 2).mean(-1, keepdims=True)
        return (v - mu) / jnp.sqrt(var + 1e-5) * g + b
    xn = ln(x, p["ln1g"], p["ln1b"])
    q = xn @ p["wq"] + p["bq"]
    k = xn @ p["wk"] + p["bk"]
    v = xn @ p["wv"] + p["bv"]
    scores = jnp.einsum("bqd,bkd->bqk", q, k) / math.sqrt(d_model)
    scores = jnp.where(mask[:, None, :] == 0, -1e9, scores)
    attn = jax.nn.softmax(scores, axis=-1)
    av = jnp.einsum("bqk,bkd->bqd", attn, v)
    out = av @ p["wo"] + p["bo"]
    y = out + out
    yn = ln(y, p["ln2g"], p["ln2b"])
    h = jnp.maximum(yn @ p["w1"] + p["b1"], 0.0)
    ff = h @ p["w2"] + p["b2"]
    return ff + ff, av


def _ref_forward(tokens, mask, params, d_model):
    S = tokens.shape[1]
    x = jnp.take(params["embed_vec"], tokens, axis=0)
    x = math.sqrt(d_model) * x + params["pe"][None, :S, :]
    x, a1 = _ref_block(x, mask, params["block1"], d_model)
    x, a2 = _ref_block(x, mask, params["block2"], d_model)
    y = x[:, 0, :] @ params["cls_w"] + params["cls_b"]
    return y, a1, a2


# ---------------------------------------------------------------------------
# Main
# ---------------------------------------------------------------------------

if __name__ == "__main__":
    B, S = 2, 8
    D_MODEL, D_FF, D_OUT = 128, 256, 2
    VOCAB, MAX_SEQ_LEN = 50, 16

    key = jax.random.PRNGKey(0)
    k_embed, k_tok, k_b1, k_b2, k_cls = jax.random.split(key, 5)

    params = {
        "embed_vec": (jax.random.normal(k_embed, (VOCAB, D_MODEL)) * 0.1).astype(jnp.float32),
        "pe": _positional_encoding(MAX_SEQ_LEN, D_MODEL),
        "block1": _block_params(k_b1, D_MODEL, D_FF),
        "block2": _block_params(k_b2, D_MODEL, D_FF),
    }
    cls_w, cls_b = _linear(k_cls, D_MODEL, D_OUT, w_std=0.02, b_std=1.0)
    params["cls_w"], params["cls_b"] = cls_w, cls_b

    tokens = jax.random.randint(k_tok, (B, S), 0, VOCAB, dtype=jnp.int32)
    mask = jnp.ones((B, S), jnp.float32).at[1, 6:].set(0.0)    # pad last 2 tokens of batch 1

    y, a1, a2 = transformer_classification_forward(
        tokens, mask, params, d_model=D_MODEL, d_output=D_OUT)
    y, a1, a2 = jax.block_until_ready((y, a1, a2))

    # sanity check vs. pure-f32 JAX reference (tolerance sized for bf16 MXU operands +
    # approx reciprocal in the kernel vs. the f32 reference path).
    y_ref, a1_ref, a2_ref = _ref_forward(tokens, mask, params, D_MODEL)
    assert jnp.allclose(y, y_ref, atol=2e-2, rtol=2e-2)
    assert jnp.allclose(a1, a1_ref, atol=2e-2, rtol=2e-2)
    assert jnp.allclose(a2, a2_ref, atol=2e-2, rtol=2e-2)

    print("KERNEL_OK")
</pallas_src>

<mosaic_0001>
module attributes {stable_mosaic.version = 11 : i64} {
  func.func @fused_transformer_kernel(%arg0: memref<16x128xf32, #tpu.memory_space<vmem>>, %arg1: memref<16x16xf32, #tpu.memory_space<vmem>>, %arg2: memref<1x128xf32, #tpu.memory_space<vmem>>, %arg3: memref<1x128xf32, #tpu.memory_space<vmem>>, %arg4: memref<128x128xf32, #tpu.memory_space<vmem>>, %arg5: memref<1x128xf32, #tpu.memory_space<vmem>>, %arg6: memref<128x128xf32, #tpu.memory_space<vmem>>, %arg7: memref<1x128xf32, #tpu.memory_space<vmem>>, %arg8: memref<128x128xf32, #tpu.memory_space<vmem>>, %arg9: memref<1x128xf32, #tpu.memory_space<vmem>>, %arg10: memref<128x128xf32, #tpu.memory_space<vmem>>, %arg11: memref<1x128xf32, #tpu.memory_space<vmem>>, %arg12: memref<1x128xf32, #tpu.memory_space<vmem>>, %arg13: memref<1x128xf32, #tpu.memory_space<vmem>>, %arg14: memref<128x256xf32, #tpu.memory_space<vmem>>, %arg15: memref<1x256xf32, #tpu.memory_space<vmem>>, %arg16: memref<256x128xf32, #tpu.memory_space<vmem>>, %arg17: memref<1x128xf32, #tpu.memory_space<vmem>>, %arg18: memref<1x128xf32, #tpu.memory_space<vmem>>, %arg19: memref<1x128xf32, #tpu.memory_space<vmem>>, %arg20: memref<128x128xf32, #tpu.memory_space<vmem>>, %arg21: memref<1x128xf32, #tpu.memory_space<vmem>>, %arg22: memref<128x128xf32, #tpu.memory_space<vmem>>, %arg23: memref<1x128xf32, #tpu.memory_space<vmem>>, %arg24: memref<128x128xf32, #tpu.memory_space<vmem>>, %arg25: memref<1x128xf32, #tpu.memory_space<vmem>>, %arg26: memref<128x128xf32, #tpu.memory_space<vmem>>, %arg27: memref<1x128xf32, #tpu.memory_space<vmem>>, %arg28: memref<1x128xf32, #tpu.memory_space<vmem>>, %arg29: memref<1x128xf32, #tpu.memory_space<vmem>>, %arg30: memref<128x256xf32, #tpu.memory_space<vmem>>, %arg31: memref<1x256xf32, #tpu.memory_space<vmem>>, %arg32: memref<256x128xf32, #tpu.memory_space<vmem>>, %arg33: memref<1x128xf32, #tpu.memory_space<vmem>>, %arg34: memref<128x128xf32, #tpu.memory_space<vmem>>, %arg35: memref<1x128xf32, #tpu.memory_space<vmem>>, %arg36: memref<16x128xf32, #tpu.memory_space<vmem>>, %arg37: memref<16x128xf32, #tpu.memory_space<vmem>>, %arg38: memref<16x128xf32, #tpu.memory_space<vmem>>) attributes {dimension_semantics = [], scalar_prefetch = 0 : i64, scratch_operands = 0 : i64, tpu.core_type = #tpu.core_type<tc>} {
    %c0 = arith.constant 0 : index
    %c0_0 = arith.constant 0 : index
    %0 = vector.load %arg1[%c0, %c0_0] : memref<16x16xf32, #tpu.memory_space<vmem>>, vector<16x16xf32>
    %c0_1 = arith.constant 0 : index
    %c0_2 = arith.constant 0 : index
    %1 = vector.load %arg0[%c0_1, %c0_2] : memref<16x128xf32, #tpu.memory_space<vmem>>, vector<16x128xf32>
    %c0_3 = arith.constant 0 : index
    %c0_4 = arith.constant 0 : index
    %2 = vector.load %arg2[%c0_3, %c0_4] : memref<1x128xf32, #tpu.memory_space<vmem>>, vector<1x128xf32>
    %c0_5 = arith.constant 0 : index
    %c0_6 = arith.constant 0 : index
    %3 = vector.load %arg3[%c0_5, %c0_6] : memref<1x128xf32, #tpu.memory_space<vmem>>, vector<1x128xf32>
    %c0_7 = arith.constant 0 : index
    %c0_8 = arith.constant 0 : index
    %4 = vector.load %arg4[%c0_7, %c0_8] : memref<128x128xf32, #tpu.memory_space<vmem>>, vector<128x128xf32>
    %c0_9 = arith.constant 0 : index
    %c0_10 = arith.constant 0 : index
    %5 = vector.load %arg5[%c0_9, %c0_10] : memref<1x128xf32, #tpu.memory_space<vmem>>, vector<1x128xf32>
    %c0_11 = arith.constant 0 : index
    %c0_12 = arith.constant 0 : index
    %6 = vector.load %arg6[%c0_11, %c0_12] : memref<128x128xf32, #tpu.memory_space<vmem>>, vector<128x128xf32>
    %c0_13 = arith.constant 0 : index
    %c0_14 = arith.constant 0 : index
    %7 = vector.load %arg7[%c0_13, %c0_14] : memref<1x128xf32, #tpu.memory_space<vmem>>, vector<1x128xf32>
    %c0_15 = arith.constant 0 : index
    %c0_16 = arith.constant 0 : index
    %8 = vector.load %arg8[%c0_15, %c0_16] : memref<128x128xf32, #tpu.memory_space<vmem>>, vector<128x128xf32>
    %c0_17 = arith.constant 0 : index
    %c0_18 = arith.constant 0 : index
    %9 = vector.load %arg9[%c0_17, %c0_18] : memref<1x128xf32, #tpu.memory_space<vmem>>, vector<1x128xf32>
    %c0_19 = arith.constant 0 : index
    %c0_20 = arith.constant 0 : index
    %10 = vector.load %arg10[%c0_19, %c0_20] : memref<128x128xf32, #tpu.memory_space<vmem>>, vector<128x128xf32>
    %c0_21 = arith.constant 0 : index
    %c0_22 = arith.constant 0 : index
    %11 = vector.load %arg11[%c0_21, %c0_22] : memref<1x128xf32, #tpu.memory_space<vmem>>, vector<1x128xf32>
    %c0_23 = arith.constant 0 : index
    %c0_24 = arith.constant 0 : index
    %12 = vector.load %arg12[%c0_23, %c0_24] : memref<1x128xf32, #tpu.memory_space<vmem>>, vector<1x128xf32>
    %c0_25 = arith.constant 0 : index
    %c0_26 = arith.constant 0 : index
    %13 = vector.load %arg13[%c0_25, %c0_26] : memref<1x128xf32, #tpu.memory_space<vmem>>, vector<1x128xf32>
    %c0_27 = arith.constant 0 : index
    %c0_28 = arith.constant 0 : index
    %14 = vector.load %arg14[%c0_27, %c0_28] : memref<128x256xf32, #tpu.memory_space<vmem>>, vector<128x256xf32>
    %c0_29 = arith.constant 0 : index
    %c0_30 = arith.constant 0 : index
    %15 = vector.load %arg15[%c0_29, %c0_30] : memref<1x256xf32, #tpu.memory_space<vmem>>, vector<1x256xf32>
    %c0_31 = arith.constant 0 : index
    %c0_32 = arith.constant 0 : index
    %16 = vector.load %arg16[%c0_31, %c0_32] : memref<256x128xf32, #tpu.memory_space<vmem>>, vector<256x128xf32>
    %c0_33 = arith.constant 0 : index
    %c0_34 = arith.constant 0 : index
    %17 = vector.load %arg17[%c0_33, %c0_34] : memref<1x128xf32, #tpu.memory_space<vmem>>, vector<1x128xf32>
    %cst = arith.constant dense<0.000000e+00> : vector<16xf32>
    %18 = vector.multi_reduction <add>, %1, %cst [1] : vector<16x128xf32> to vector<16xf32>
    %19 = vector.shape_cast %18 : vector<16xf32> to vector<16x1xf32>
    %cst_35 = arith.constant 1.280000e+02 : f32
    %20 = vector.broadcast %cst_35 : f32 to vector<16x1xf32>
    %21 = arith.divf %19, %20 : vector<16x1xf32>
    %22 = vector.broadcast %21 : vector<16x1xf32> to vector<16x128xf32>
    %23 = arith.subf %1, %22 : vector<16x128xf32>
    %24 = arith.mulf %23, %23 : vector<16x128xf32>
    %cst_36 = arith.constant dense<0.000000e+00> : vector<16xf32>
    %25 = vector.multi_reduction <add>, %24, %cst_36 [1] : vector<16x128xf32> to vector<16xf32>
    %26 = vector.shape_cast %25 : vector<16xf32> to vector<16x1xf32>
    %cst_37 = arith.constant 1.280000e+02 : f32
    %27 = vector.broadcast %cst_37 : f32 to vector<16x1xf32>
    %28 = arith.divf %26, %27 : vector<16x1xf32>
    %29 = vector.broadcast %21 : vector<16x1xf32> to vector<16x128xf32>
    %30 = arith.subf %1, %29 : vector<16x128xf32>
    %cst_38 = arith.constant 9.99999974E-6 : f32
    %31 = vector.broadcast %cst_38 : f32 to vector<16x1xf32>
    %32 = arith.addf %28, %31 : vector<16x1xf32>
    %33 = math.rsqrt %32 : vector<16x1xf32>
    %34 = vector.broadcast %33 : vector<16x1xf32> to vector<16x128xf32>
    %35 = arith.mulf %30, %34 : vector<16x128xf32>
    %36 = vector.broadcast %2 : vector<1x128xf32> to vector<16x128xf32>
    %37 = arith.mulf %35, %36 : vector<16x128xf32>
    %38 = vector.broadcast %3 : vector<1x128xf32> to vector<16x128xf32>
    %39 = arith.addf %37, %38 : vector<16x128xf32>
    %40 = arith.truncf %39 : vector<16x128xf32> to vector<16x128xbf16>
    %41 = arith.truncf %4 : vector<128x128xf32> to vector<128x128xbf16>
    %cst_39 = arith.constant dense<0.000000e+00> : vector<16x128xf32>
    %42 = tpu.matmul %40, %41, %cst_39 {dimension_numbers = #tpu.dot_dimension_numbers<[1], [0], [0], [1], [0, 0, 1, 1], [], []>} : vector<16x128xbf16>, vector<128x128xbf16>, vector<16x128xf32> -> vector<16x128xf32>
    %43 = vector.broadcast %5 : vector<1x128xf32> to vector<16x128xf32>
    %44 = arith.addf %42, %43 : vector<16x128xf32>
    %45 = arith.truncf %39 : vector<16x128xf32> to vector<16x128xbf16>
    %46 = arith.truncf %6 : vector<128x128xf32> to vector<128x128xbf16>
    %cst_40 = arith.constant dense<0.000000e+00> : vector<16x128xf32>
    %47 = tpu.matmul %45, %46, %cst_40 {dimension_numbers = #tpu.dot_dimension_numbers<[1], [0], [0], [1], [0, 0, 1, 1], [], []>} : vector<16x128xbf16>, vector<128x128xbf16>, vector<16x128xf32> -> vector<16x128xf32>
    %48 = vector.broadcast %7 : vector<1x128xf32> to vector<16x128xf32>
    %49 = arith.addf %47, %48 : vector<16x128xf32>
    %50 = arith.truncf %39 : vector<16x128xf32> to vector<16x128xbf16>
    %51 = arith.truncf %8 : vector<128x128xf32> to vector<128x128xbf16>
    %cst_41 = arith.constant dense<0.000000e+00> : vector<16x128xf32>
    %52 = tpu.matmul %50, %51, %cst_41 {dimension_numbers = #tpu.dot_dimension_numbers<[1], [0], [0], [1], [0, 0, 1, 1], [], []>} : vector<16x128xbf16>, vector<128x128xbf16>, vector<16x128xf32> -> vector<16x128xf32>
    %53 = vector.broadcast %9 : vector<1x128xf32> to vector<16x128xf32>
    %54 = arith.addf %52, %53 : vector<16x128xf32>
    %55 = arith.truncf %44 : vector<16x128xf32> to vector<16x128xbf16>
    %56 = arith.truncf %49 : vector<16x128xf32> to vector<16x128xbf16>
    %cst_42 = arith.constant dense<0.000000e+00> : vector<16x16xf32>
    %57 = tpu.matmul %55, %56, %cst_42 {dimension_numbers = #tpu.dot_dimension_numbers<[1], [1], [0], [0], [0, 0, 1, 0], [], []>} : vector<16x128xbf16>, vector<16x128xbf16>, vector<16x16xf32> -> vector<16x16xf32>
    %cst_43 = arith.constant 0.0883883461 : f32
    %58 = vector.broadcast %cst_43 : f32 to vector<16x16xf32>
    %59 = arith.mulf %57, %58 : vector<16x16xf32>
    %cst_44 = arith.constant 0.000000e+00 : f32
    %60 = vector.broadcast %cst_44 : f32 to vector<16x16xf32>
    %61 = arith.cmpf oeq, %0, %60 : vector<16x16xf32>
    %cst_45 = arith.constant -1.000000e+09 : f32
    %62 = vector.broadcast %cst_45 : f32 to vector<16x16xf32>
    %63 = arith.select %61, %62, %59 : vector<16x16xi1>, vector<16x16xf32>
    %cst_46 = arith.constant dense<0xFF800000> : vector<16xf32>
    %64 = vector.multi_reduction <maximumf>, %63, %cst_46 [1] : vector<16x16xf32> to vector<16xf32>
    %65 = vector.shape_cast %64 : vector<16xf32> to vector<16x1xf32>
    %66 = vector.broadcast %65 : vector<16x1xf32> to vector<16x16xf32>
    %67 = arith.subf %63, %66 : vector<16x16xf32>
    %68 = math.exp %67 : vector<16x16xf32>
    %cst_47 = arith.constant dense<0.000000e+00> : vector<16xf32>
    %69 = vector.multi_reduction <add>, %68, %cst_47 [1] : vector<16x16xf32> to vector<16xf32>
    %70 = vector.shape_cast %69 : vector<16xf32> to vector<16x1xf32>
    %71 = tpu.reciprocal %70 {approx = true} : vector<16x1xf32> -> vector<16x1xf32>
    %72 = vector.broadcast %71 : vector<16x1xf32> to vector<16x16xf32>
    %73 = arith.mulf %68, %72 : vector<16x16xf32>
    %74 = arith.truncf %73 : vector<16x16xf32> to vector<16x16xbf16>
    %75 = arith.truncf %54 : vector<16x128xf32> to vector<16x128xbf16>
    %cst_48 = arith.constant dense<0.000000e+00> : vector<16x128xf32>
    %76 = tpu.matmul %74, %75, %cst_48 {dimension_numbers = #tpu.dot_dimension_numbers<[1], [0], [0], [1], [0, 0, 1, 1], [], []>} : vector<16x16xbf16>, vector<16x128xbf16>, vector<16x128xf32> -> vector<16x128xf32>
    %77 = arith.truncf %76 : vector<16x128xf32> to vector<16x128xbf16>
    %78 = arith.truncf %10 : vector<128x128xf32> to vector<128x128xbf16>
    %cst_49 = arith.constant dense<0.000000e+00> : vector<16x128xf32>
    %79 = tpu.matmul %77, %78, %cst_49 {dimension_numbers = #tpu.dot_dimension_numbers<[1], [0], [0], [1], [0, 0, 1, 1], [], []>} : vector<16x128xbf16>, vector<128x128xbf16>, vector<16x128xf32> -> vector<16x128xf32>
    %80 = vector.broadcast %11 : vector<1x128xf32> to vector<16x128xf32>
    %81 = arith.addf %79, %80 : vector<16x128xf32>
    %82 = arith.addf %81, %81 : vector<16x128xf32>
    %cst_50 = arith.constant dense<0.000000e+00> : vector<16xf32>
    %83 = vector.multi_reduction <add>, %82, %cst_50 [1] : vector<16x128xf32> to vector<16xf32>
    %84 = vector.shape_cast %83 : vector<16xf32> to vector<16x1xf32>
    %cst_51 = arith.constant 1.280000e+02 : f32
    %85 = vector.broadcast %cst_51 : f32 to vector<16x1xf32>
    %86 = arith.divf %84, %85 : vector<16x1xf32>
    %87 = vector.broadcast %86 : vector<16x1xf32> to vector<16x128xf32>
    %88 = arith.subf %82, %87 : vector<16x128xf32>
    %89 = arith.mulf %88, %88 : vector<16x128xf32>
    %cst_52 = arith.constant dense<0.000000e+00> : vector<16xf32>
    %90 = vector.multi_reduction <add>, %89, %cst_52 [1] : vector<16x128xf32> to vector<16xf32>
    %91 = vector.shape_cast %90 : vector<16xf32> to vector<16x1xf32>
    %cst_53 = arith.constant 1.280000e+02 : f32
    %92 = vector.broadcast %cst_53 : f32 to vector<16x1xf32>
    %93 = arith.divf %91, %92 : vector<16x1xf32>
    %94 = vector.broadcast %86 : vector<16x1xf32> to vector<16x128xf32>
    %95 = arith.subf %82, %94 : vector<16x128xf32>
    %cst_54 = arith.constant 9.99999974E-6 : f32
    %96 = vector.broadcast %cst_54 : f32 to vector<16x1xf32>
    %97 = arith.addf %93, %96 : vector<16x1xf32>
    %98 = math.rsqrt %97 : vector<16x1xf32>
    %99 = vector.broadcast %98 : vector<16x1xf32> to vector<16x128xf32>
    %100 = arith.mulf %95, %99 : vector<16x128xf32>
    %101 = vector.broadcast %12 : vector<1x128xf32> to vector<16x128xf32>
    %102 = arith.mulf %100, %101 : vector<16x128xf32>
    %103 = vector.broadcast %13 : vector<1x128xf32> to vector<16x128xf32>
    %104 = arith.addf %102, %103 : vector<16x128xf32>
    %105 = arith.truncf %104 : vector<16x128xf32> to vector<16x128xbf16>
    %106 = arith.truncf %14 : vector<128x256xf32> to vector<128x256xbf16>
    %cst_55 = arith.constant dense<0.000000e+00> : vector<16x256xf32>
    %107 = tpu.matmul %105, %106, %cst_55 {dimension_numbers = #tpu.dot_dimension_numbers<[1], [0], [0], [1], [0, 0, 1, 1], [], []>} : vector<16x128xbf16>, vector<128x256xbf16>, vector<16x256xf32> -> vector<16x256xf32>
    %108 = vector.broadcast %15 : vector<1x256xf32> to vector<16x256xf32>
    %109 = arith.addf %107, %108 : vector<16x256xf32>
    %cst_56 = arith.constant 0.000000e+00 : f32
    %110 = vector.broadcast %cst_56 : f32 to vector<16x256xf32>
    %111 = arith.maximumf %109, %110 : vector<16x256xf32>
    %112 = arith.truncf %111 : vector<16x256xf32> to vector<16x256xbf16>
    %113 = arith.truncf %16 : vector<256x128xf32> to vector<256x128xbf16>
    %cst_57 = arith.constant dense<0.000000e+00> : vector<16x128xf32>
    %114 = tpu.matmul %112, %113, %cst_57 {dimension_numbers = #tpu.dot_dimension_numbers<[1], [0], [0], [1], [0, 0, 1, 1], [], []>} : vector<16x256xbf16>, vector<256x128xbf16>, vector<16x128xf32> -> vector<16x128xf32>
    %115 = vector.broadcast %17 : vector<1x128xf32> to vector<16x128xf32>
    %116 = arith.addf %114, %115 : vector<16x128xf32>
    %117 = arith.addf %116, %116 : vector<16x128xf32>
    %c0_58 = arith.constant 0 : index
    %c0_59 = arith.constant 0 : index
    %118 = vector.load %arg36[%c0_58, %c0_59] : memref<16x128xf32, #tpu.memory_space<vmem>>, vector<16x128xf32>
    tpu.vector_store %arg36[%c0_58, %c0_59], %76 {strides = array<i32>} : memref<16x128xf32, #tpu.memory_space<vmem>>, vector<16x128xf32>,
    %c0_60 = arith.constant 0 : index
    %c0_61 = arith.constant 0 : index
    %119 = vector.load %arg18[%c0_60, %c0_61] : memref<1x128xf32, #tpu.memory_space<vmem>>, vector<1x128xf32>
    %c0_62 = arith.constant 0 : index
    %c0_63 = arith.constant 0 : index
    %120 = vector.load %arg19[%c0_62, %c0_63] : memref<1x128xf32, #tpu.memory_space<vmem>>, vector<1x128xf32>
    %c0_64 = arith.constant 0 : index
    %c0_65 = arith.constant 0 : index
    %121 = vector.load %arg20[%c0_64, %c0_65] : memref<128x128xf32, #tpu.memory_space<vmem>>, vector<128x128xf32>
    %c0_66 = arith.constant 0 : index
    %c0_67 = arith.constant 0 : index
    %122 = vector.load %arg21[%c0_66, %c0_67] : memref<1x128xf32, #tpu.memory_space<vmem>>, vector<1x128xf32>
    %c0_68 = arith.constant 0 : index
    %c0_69 = arith.constant 0 : index
    %123 = vector.load %arg22[%c0_68, %c0_69] : memref<128x128xf32, #tpu.memory_space<vmem>>, vector<128x128xf32>
    %c0_70 = arith.constant 0 : index
    %c0_71 = arith.constant 0 : index
    %124 = vector.load %arg23[%c0_70, %c0_71] : memref<1x128xf32, #tpu.memory_space<vmem>>, vector<1x128xf32>
    %c0_72 = arith.constant 0 : index
    %c0_73 = arith.constant 0 : index
    %125 = vector.load %arg24[%c0_72, %c0_73] : memref<128x128xf32, #tpu.memory_space<vmem>>, vector<128x128xf32>
    %c0_74 = arith.constant 0 : index
    %c0_75 = arith.constant 0 : index
    %126 = vector.load %arg25[%c0_74, %c0_75] : memref<1x128xf32, #tpu.memory_space<vmem>>, vector<1x128xf32>
    %c0_76 = arith.constant 0 : index
    %c0_77 = arith.constant 0 : index
    %127 = vector.load %arg26[%c0_76, %c0_77] : memref<128x128xf32, #tpu.memory_space<vmem>>, vector<128x128xf32>
    %c0_78 = arith.constant 0 : index
    %c0_79 = arith.constant 0 : index
    %128 = vector.load %arg27[%c0_78, %c0_79] : memref<1x128xf32, #tpu.memory_space<vmem>>, vector<1x128xf32>
    %c0_80 = arith.constant 0 : index
    %c0_81 = arith.constant 0 : index
    %129 = vector.load %arg28[%c0_80, %c0_81] : memref<1x128xf32, #tpu.memory_space<vmem>>, vector<1x128xf32>
    %c0_82 = arith.constant 0 : index
    %c0_83 = arith.constant 0 : index
    %130 = vector.load %arg29[%c0_82, %c0_83] : memref<1x128xf32, #tpu.memory_space<vmem>>, vector<1x128xf32>
    %c0_84 = arith.constant 0 : index
    %c0_85 = arith.constant 0 : index
    %131 = vector.load %arg30[%c0_84, %c0_85] : memref<128x256xf32, #tpu.memory_space<vmem>>, vector<128x256xf32>
    %c0_86 = arith.constant 0 : index
    %c0_87 = arith.constant 0 : index
    %132 = vector.load %arg31[%c0_86, %c0_87] : memref<1x256xf32, #tpu.memory_space<vmem>>, vector<1x256xf32>
    %c0_88 = arith.constant 0 : index
    %c0_89 = arith.constant 0 : index
    %133 = vector.load %arg32[%c0_88, %c0_89] : memref<256x128xf32, #tpu.memory_space<vmem>>, vector<256x128xf32>
    %c0_90 = arith.constant 0 : index
    %c0_91 = arith.constant 0 : index
    %134 = vector.load %arg33[%c0_90, %c0_91] : memref<1x128xf32, #tpu.memory_space<vmem>>, vector<1x128xf32>
    %cst_92 = arith.constant dense<0.000000e+00> : vector<16xf32>
    %135 = vector.multi_reduction <add>, %117, %cst_92 [1] : vector<16x128xf32> to vector<16xf32>
    %136 = vector.shape_cast %135 : vector<16xf32> to vector<16x1xf32>
    %cst_93 = arith.constant 1.280000e+02 : f32
    %137 = vector.broadcast %cst_93 : f32 to vector<16x1xf32>
    %138 = arith.divf %136, %137 : vector<16x1xf32>
    %139 = vector.broadcast %138 : vector<16x1xf32> to vector<16x128xf32>
    %140 = arith.subf %117, %139 : vector<16x128xf32>
    %141 = arith.mulf %140, %140 : vector<16x128xf32>
    %cst_94 = arith.constant dense<0.000000e+00> : vector<16xf32>
    %142 = vector.multi_reduction <add>, %141, %cst_94 [1] : vector<16x128xf32> to vector<16xf32>
    %143 = vector.shape_cast %142 : vector<16xf32> to vector<16x1xf32>
    %cst_95 = arith.constant 1.280000e+02 : f32
    %144 = vector.broadcast %cst_95 : f32 to vector<16x1xf32>
    %145 = arith.divf %143, %144 : vector<16x1xf32>
    %146 = vector.broadcast %138 : vector<16x1xf32> to vector<16x128xf32>
    %147 = arith.subf %117, %146 : vector<16x128xf32>
    %cst_96 = arith.constant 9.99999974E-6 : f32
    %148 = vector.broadcast %cst_96 : f32 to vector<16x1xf32>
    %149 = arith.addf %145, %148 : vector<16x1xf32>
    %150 = math.rsqrt %149 : vector<16x1xf32>
    %151 = vector.broadcast %150 : vector<16x1xf32> to vector<16x128xf32>
    %152 = arith.mulf %147, %151 : vector<16x128xf32>
    %153 = vector.broadcast %119 : vector<1x128xf32> to vector<16x128xf32>
    %154 = arith.mulf %152, %153 : vector<16x128xf32>
    %155 = vector.broadcast %120 : vector<1x128xf32> to vector<16x128xf32>
    %156 = arith.addf %154, %155 : vector<16x128xf32>
    %157 = arith.truncf %156 : vector<16x128xf32> to vector<16x128xbf16>
    %158 = arith.truncf %121 : vector<128x128xf32> to vector<128x128xbf16>
    %cst_97 = arith.constant dense<0.000000e+00> : vector<16x128xf32>
    %159 = tpu.matmul %157, %158, %cst_97 {dimension_numbers = #tpu.dot_dimension_numbers<[1], [0], [0], [1], [0, 0, 1, 1], [], []>} : vector<16x128xbf16>, vector<128x128xbf16>, vector<16x128xf32> -> vector<16x128xf32>
    %160 = vector.broadcast %122 : vector<1x128xf32> to vector<16x128xf32>
    %161 = arith.addf %159, %160 : vector<16x128xf32>
    %162 = arith.truncf %156 : vector<16x128xf32> to vector<16x128xbf16>
    %163 = arith.truncf %123 : vector<128x128xf32> to vector<128x128xbf16>
    %cst_98 = arith.constant dense<0.000000e+00> : vector<16x128xf32>
    %164 = tpu.matmul %162, %163, %cst_98 {dimension_numbers = #tpu.dot_dimension_numbers<[1], [0], [0], [1], [0, 0, 1, 1], [], []>} : vector<16x128xbf16>, vector<128x128xbf16>, vector<16x128xf32> -> vector<16x128xf32>
    %165 = vector.broadcast %124 : vector<1x128xf32> to vector<16x128xf32>
    %166 = arith.addf %164, %165 : vector<16x128xf32>
    %167 = arith.truncf %156 : vector<16x128xf32> to vector<16x128xbf16>
    %168 = arith.truncf %125 : vector<128x128xf32> to vector<128x128xbf16>
    %cst_99 = arith.constant dense<0.000000e+00> : vector<16x128xf32>
    %169 = tpu.matmul %167, %168, %cst_99 {dimension_numbers = #tpu.dot_dimension_numbers<[1], [0], [0], [1], [0, 0, 1, 1], [], []>} : vector<16x128xbf16>, vector<128x128xbf16>, vector<16x128xf32> -> vector<16x128xf32>
    %170 = vector.broadcast %126 : vector<1x128xf32> to vector<16x128xf32>
    %171 = arith.addf %169, %170 : vector<16x128xf32>
    %172 = arith.truncf %161 : vector<16x128xf32> to vector<16x128xbf16>
    %173 = arith.truncf %166 : vector<16x128xf32> to vector<16x128xbf16>
    %cst_100 = arith.constant dense<0.000000e+00> : vector<16x16xf32>
    %174 = tpu.matmul %172, %173, %cst_100 {dimension_numbers = #tpu.dot_dimension_numbers<[1], [1], [0], [0], [0, 0, 1, 0], [], []>} : vector<16x128xbf16>, vector<16x128xbf16>, vector<16x16xf32> -> vector<16x16xf32>
    %cst_101 = arith.constant 0.0883883461 : f32
    %175 = vector.broadcast %cst_101 : f32 to vector<16x16xf32>
    %176 = arith.mulf %174, %175 : vector<16x16xf32>
    %cst_102 = arith.constant 0.000000e+00 : f32
    %177 = vector.broadcast %cst_102 : f32 to vector<16x16xf32>
    %178 = arith.cmpf oeq, %0, %177 : vector<16x16xf32>
    %cst_103 = arith.constant -1.000000e+09 : f32
    %179 = vector.broadcast %cst_103 : f32 to vector<16x16xf32>
    %180 = arith.select %178, %179, %176 : vector<16x16xi1>, vector<16x16xf32>
    %cst_104 = arith.constant dense<0xFF800000> : vector<16xf32>
    %181 = vector.multi_reduction <maximumf>, %180, %cst_104 [1] : vector<16x16xf32> to vector<16xf32>
    %182 = vector.shape_cast %181 : vector<16xf32> to vector<16x1xf32>
    %183 = vector.broadcast %182 : vector<16x1xf32> to vector<16x16xf32>
    %184 = arith.subf %180, %183 : vector<16x16xf32>
    %185 = math.exp %184 : vector<16x16xf32>
    %cst_105 = arith.constant dense<0.000000e+00> : vector<16xf32>
    %186 = vector.multi_reduction <add>, %185, %cst_105 [1] : vector<16x16xf32> to vector<16xf32>
    %187 = vector.shape_cast %186 : vector<16xf32> to vector<16x1xf32>
    %188 = tpu.reciprocal %187 {approx = true} : vector<16x1xf32> -> vector<16x1xf32>
    %189 = vector.broadcast %188 : vector<16x1xf32> to vector<16x16xf32>
    %190 = arith.mulf %185, %189 : vector<16x16xf32>
    %191 = arith.truncf %190 : vector<16x16xf32> to vector<16x16xbf16>
    %192 = arith.truncf %171 : vector<16x128xf32> to vector<16x128xbf16>
    %cst_106 = arith.constant dense<0.000000e+00> : vector<16x128xf32>
    %193 = tpu.matmul %191, %192, %cst_106 {dimension_numbers = #tpu.dot_dimension_numbers<[1], [0], [0], [1], [0, 0, 1, 1], [], []>} : vector<16x16xbf16>, vector<16x128xbf16>, vector<16x128xf32> -> vector<16x128xf32>
    %194 = arith.truncf %193 : vector<16x128xf32> to vector<16x128xbf16>
    %195 = arith.truncf %127 : vector<128x128xf32> to vector<128x128xbf16>
    %cst_107 = arith.constant dense<0.000000e+00> : vector<16x128xf32>
    %196 = tpu.matmul %194, %195, %cst_107 {dimension_numbers = #tpu.dot_dimension_numbers<[1], [0], [0], [1], [0, 0, 1, 1], [], []>} : vector<16x128xbf16>, vector<128x128xbf16>, vector<16x128xf32> -> vector<16x128xf32>
    %197 = vector.broadcast %128 : vector<1x128xf32> to vector<16x128xf32>
    %198 = arith.addf %196, %197 : vector<16x128xf32>
    %199 = arith.addf %198, %198 : vector<16x128xf32>
    %cst_108 = arith.constant dense<0.000000e+00> : vector<16xf32>
    %200 = vector.multi_reduction <add>, %199, %cst_108 [1] : vector<16x128xf32> to vector<16xf32>
    %201 = vector.shape_cast %200 : vector<16xf32> to vector<16x1xf32>
    %cst_109 = arith.constant 1.280000e+02 : f32
    %202 = vector.broadcast %cst_109 : f32 to vector<16x1xf32>
    %203 = arith.divf %201, %202 : vector<16x1xf32>
    %204 = vector.broadcast %203 : vector<16x1xf32> to vector<16x128xf32>
    %205 = arith.subf %199, %204 : vector<16x128xf32>
    %206 = arith.mulf %205, %205 : vector<16x128xf32>
    %cst_110 = arith.constant dense<0.000000e+00> : vector<16xf32>
    %207 = vector.multi_reduction <add>, %206, %cst_110 [1] : vector<16x128xf32> to vector<16xf32>
    %208 = vector.shape_cast %207 : vector<16xf32> to vector<16x1xf32>
    %cst_111 = arith.constant 1.280000e+02 : f32
    %209 = vector.broadcast %cst_111 : f32 to vector<16x1xf32>
    %210 = arith.divf %208, %209 : vector<16x1xf32>
    %211 = vector.broadcast %203 : vector<16x1xf32> to vector<16x128xf32>
    %212 = arith.subf %199, %211 : vector<16x128xf32>
    %cst_112 = arith.constant 9.99999974E-6 : f32
    %213 = vector.broadcast %cst_112 : f32 to vector<16x1xf32>
    %214 = arith.addf %210, %213 : vector<16x1xf32>
    %215 = math.rsqrt %214 : vector<16x1xf32>
    %216 = vector.broadcast %215 : vector<16x1xf32> to vector<16x128xf32>
    %217 = arith.mulf %212, %216 : vector<16x128xf32>
    %218 = vector.broadcast %129 : vector<1x128xf32> to vector<16x128xf32>
    %219 = arith.mulf %217, %218 : vector<16x128xf32>
    %220 = vector.broadcast %130 : vector<1x128xf32> to vector<16x128xf32>
    %221 = arith.addf %219, %220 : vector<16x128xf32>
    %222 = arith.truncf %221 : vector<16x128xf32> to vector<16x128xbf16>
    %223 = arith.truncf %131 : vector<128x256xf32> to vector<128x256xbf16>
    %cst_113 = arith.constant dense<0.000000e+00> : vector<16x256xf32>
    %224 = tpu.matmul %222, %223, %cst_113 {dimension_numbers = #tpu.dot_dimension_numbers<[1], [0], [0], [1], [0, 0, 1, 1], [], []>} : vector<16x128xbf16>, vector<128x256xbf16>, vector<16x256xf32> -> vector<16x256xf32>
    %225 = vector.broadcast %132 : vector<1x256xf32> to vector<16x256xf32>
    %226 = arith.addf %224, %225 : vector<16x256xf32>
    %cst_114 = arith.constant 0.000000e+00 : f32
    %227 = vector.broadcast %cst_114 : f32 to vector<16x256xf32>
    %228 = arith.maximumf %226, %227 : vector<16x256xf32>
    %229 = arith.truncf %228 : vector<16x256xf32> to vector<16x256xbf16>
    %230 = arith.truncf %133 : vector<256x128xf32> to vector<256x128xbf16>
    %cst_115 = arith.constant dense<0.000000e+00> : vector<16x128xf32>
    %231 = tpu.matmul %229, %230, %cst_115 {dimension_numbers = #tpu.dot_dimension_numbers<[1], [0], [0], [1], [0, 0, 1, 1], [], []>} : vector<16x256xbf16>, vector<256x128xbf16>, vector<16x128xf32> -> vector<16x128xf32>
    %232 = vector.broadcast %134 : vector<1x128xf32> to vector<16x128xf32>
    %233 = arith.addf %231, %232 : vector<16x128xf32>
    %234 = arith.addf %233, %233 : vector<16x128xf32>
    %c0_116 = arith.constant 0 : index
    %c0_117 = arith.constant 0 : index
    %235 = vector.load %arg37[%c0_116, %c0_117] : memref<16x128xf32, #tpu.memory_space<vmem>>, vector<16x128xf32>
    tpu.vector_store %arg37[%c0_116, %c0_117], %193 {strides = array<i32>} : memref<16x128xf32, #tpu.memory_space<vmem>>, vector<16x128xf32>,
    %c0_118 = arith.constant 0 : index
    %c0_119 = arith.constant 0 : index
    %236 = vector.load %arg34[%c0_118, %c0_119] : memref<128x128xf32, #tpu.memory_space<vmem>>, vector<128x128xf32>
    %c0_120 = arith.constant 0 : index
    %c0_121 = arith.constant 0 : index
    %237 = vector.load %arg35[%c0_120, %c0_121] : memref<1x128xf32, #tpu.memory_space<vmem>>, vector<1x128xf32>
    %238 = arith.truncf %234 : vector<16x128xf32> to vector<16x128xbf16>
    %239 = arith.truncf %236 : vector<128x128xf32> to vector<128x128xbf16>
    %cst_122 = arith.constant dense<0.000000e+00> : vector<16x128xf32>
    %240 = tpu.matmul %238, %239, %cst_122 {dimension_numbers = #tpu.dot_dimension_numbers<[1], [0], [0], [1], [0, 0, 1, 1], [], []>} : vector<16x128xbf16>, vector<128x128xbf16>, vector<16x128xf32> -> vector<16x128xf32>
    %241 = vector.broadcast %237 : vector<1x128xf32> to vector<16x128xf32>
    %242 = arith.addf %240, %241 : vector<16x128xf32>
    %c0_123 = arith.constant 0 : index
    %c0_124 = arith.constant 0 : index
    %243 = vector.load %arg38[%c0_123, %c0_124] : memref<16x128xf32, #tpu.memory_space<vmem>>, vector<16x128xf32>
    tpu.vector_store %arg38[%c0_123, %c0_124], %242 {strides = array<i32>} : memref<16x128xf32, #tpu.memory_space<vmem>>, vector<16x128xf32>,
    return
  }
}

</mosaic_0001>

<llo_original>
// kernel: transformer_classification_forward.1
$region0: #{transformer_classification_forward.1}
  #allocation0 [shape = 'u32[]', space=smem, size = 0x4, offset = 0x4, fixed_abs, tag = 'smem constant byte address 0x4 - core index']
  #allocation1 [shape = 'u32[72,128]{1,0:T(1,128)}', space=vmem, size = 0x9000, scoped, tag = 'internal scratch']
  %s0 = inlined_call_operand.smem [shape: u32[39], index: -1, kind: input, shape index: {}]
  %s1 = sld [smem:[%s0]]
  %s2 = scalar_lea.smem %s0, 1
  %s3 = sld [smem:[%s2]]
  %s4 = scalar_lea.smem %s0, 2
  %s5 = sld [smem:[%s4]]
  %s6 = scalar_lea.smem %s0, 3
  %s7 = sld [smem:[%s6]]
  %s8 = scalar_lea.smem %s0, 4
  %s9 = sld [smem:[%s8]]
  %s10 = scalar_lea.smem %s0, 5
  %s11 = sld [smem:[%s10]]
  %s12 = scalar_lea.smem %s0, 6
  %s13 = sld [smem:[%s12]]
  %s14 = scalar_lea.smem %s0, 7
  %s15 = sld [smem:[%s14]]
  %s16 = scalar_lea.smem %s0, 8
  %s17 = sld [smem:[%s16]]
  %s18 = scalar_lea.smem %s0, 9
  %s19 = sld [smem:[%s18]]
  %s20 = scalar_lea.smem %s0, 10
  %s21 = sld [smem:[%s20]]
  %s22 = scalar_lea.smem %s0, 11
  %s23 = sld [smem:[%s22]]
  %s24 = scalar_lea.smem %s0, 12
  %s25 = sld [smem:[%s24]]
  %s26 = scalar_lea.smem %s0, 13
  %s27 = sld [smem:[%s26]]
  %s28 = scalar_lea.smem %s0, 14
  %s29 = sld [smem:[%s28]]
  %s30 = scalar_lea.smem %s0, 15
  %s31 = sld [smem:[%s30]]
  %s32 = scalar_lea.smem %s0, 16
  %s33 = sld [smem:[%s32]]
  %s34 = scalar_lea.smem %s0, 17
  %s35 = sld [smem:[%s34]]
  %s36 = scalar_lea.smem %s0, 18
  %s37 = sld [smem:[%s36]]
  %s38 = scalar_lea.smem %s0, 19
  %s39 = sld [smem:[%s38]]
  %s40 = scalar_lea.smem %s0, 20
  %s41 = sld [smem:[%s40]]
  %s42 = scalar_lea.smem %s0, 21
  %s43 = sld [smem:[%s42]]
  %s44 = scalar_lea.smem %s0, 22
  %s45 = sld [smem:[%s44]]
  %s46 = scalar_lea.smem %s0, 23
  %s47 = sld [smem:[%s46]]
  %s48 = scalar_lea.smem %s0, 24
  %s49 = sld [smem:[%s48]]
  %s50 = scalar_lea.smem %s0, 25
  %s51 = sld [smem:[%s50]]
  %s52 = scalar_lea.smem %s0, 26
  %s53 = sld [smem:[%s52]]
  %s54 = scalar_lea.smem %s0, 27
  %s55 = sld [smem:[%s54]]
  %s56 = scalar_lea.smem %s0, 28
  %s57 = sld [smem:[%s56]]
  %s58 = scalar_lea.smem %s0, 29
  %s59 = sld [smem:[%s58]]
  %s60 = scalar_lea.smem %s0, 30
  %s61 = sld [smem:[%s60]]
  %s62 = scalar_lea.smem %s0, 31
  %s63 = sld [smem:[%s62]]
  %s64 = scalar_lea.smem %s0, 32
  %s65 = sld [smem:[%s64]]
  %s66 = scalar_lea.smem %s0, 33
  %s67 = sld [smem:[%s66]]
  %s68 = scalar_lea.smem %s0, 34
  %s69 = sld [smem:[%s68]]
  %s70 = scalar_lea.smem %s0, 35
  %s71 = sld [smem:[%s70]]
  %s72 = scalar_lea.smem %s0, 36
  %s73 = sld [smem:[%s72]]
  %s74 = scalar_lea.smem %s0, 37
  %s75 = sld [smem:[%s74]]
  %s76 = scalar_lea.smem %s0, 38
  %s77 = sld [smem:[%s76]]
  %78 = xla_tuple %s73, %s75, %s77
  %s79 = sld [smem:[#allocation0]]
  $region202: #{transformer_classification_forward.1} parent=0
    _
  %s81 = ssub.s32 1, %s79
  %s82 = scalar_select 0, %s81, %s79
  $region1: #{transformer_classification_forward.1} parent=0
    #allocation2 [shape = 'u8[65536]{0}', space=vmem, size = 0x10000, scoped, tag = 'input window, operand 8, single buffered']
    #allocation3 [shape = 's32[1]{0}', space=sflag, size = 0x4, scoped, tag = 'scoped memory for transformer_classification_forward.1']
    #allocation4 [shape = 's32[1]{0}', space=sflag, size = 0x4, scoped, tag = 'scoped memory for transformer_classification_forward.1']
    #allocation5 [shape = 'u8[65536]{0}', space=vmem, size = 0x10000, scoped, tag = 'input window, operand 10, single buffered']
    #allocation6 [shape = 's32[1]{0}', space=sflag, size = 0x4, scoped, tag = 'scoped memory for transformer_classification_forward.1']
    #allocation7 [shape = 'u8[65536]{0}', space=vmem, size = 0x10000, scoped, tag = 'input window, operand 20, single buffered']
    #allocation8 [shape = 'u8[65536]{0}', space=vmem, size = 0x10000, scoped, tag = 'input window, operand 22, single buffered']
    #allocation9 [shape = 's32[1]{0}', space=sflag, size = 0x4, scoped, tag = 'scoped memory for transformer_classification_forward.1']
    #allocation10 [shape = 'u8[65536]{0}', space=vmem, size = 0x10000, scoped, tag = 'input window, operand 24, single buffered']
    #allocation11 [shape = 'u8[65536]{0}', space=vmem, size = 0x10000, scoped, tag = 'input window, operand 26, single buffered']
    #allocation12 [shape = 's32[1]{0}', space=sflag, size = 0x4, scoped, tag = 'scoped memory for transformer_classification_forward.1']
    #allocation13 [shape = 'u8[131072]{0}', space=vmem, size = 0x20000, scoped, tag = 'input window, operand 30, single buffered']
    #allocation14 [shape = 'u8[131072]{0}', space=vmem, size = 0x20000, scoped, tag = 'input window, operand 32, single buffered']
    #allocation15 [shape = 's32[1]{0}', space=sflag, size = 0x4, scoped, tag = 'scoped memory for transformer_classification_forward.1']
    #allocation16 [shape = 'u8[8192]{0}', space=vmem, size = 0x2000, scoped, tag = 'output window, operand 0, single buffered']
    #allocation17 [shape = 'u8[8192]{0}', space=vmem, size = 0x2000, scoped, tag = 'output window, operand 1, single buffered']
    #allocation18 [shape = 's32[1]{0}', space=sflag, size = 0x4, scoped, tag = 'scoped memory for transformer_classification_forward.1']
    %83 = vsyncpa [#allocation3], 0
    %84 = vsyncpa [#allocation6], 0
    %85 = vsyncpa [#allocation9], 0
    %86 = vsyncpa [#allocation12], 0
    %87 = vsyncpa [#allocation15], 0
    %88 = vsyncpa [#allocation4], 0
    %89 = vsyncpa [#allocation18], 0
    // Predicated region
    $region2: #{transformer_classification_forward.1} parent=1 // pred_check
      _
    $region3: #{transformer_classification_forward.1} parent=1 // pred_check_branch
      %91 = sbr.rel (0) target = $region5
    $region4: #{transformer_classification_forward.1} parent=1 // pred_region
      _
    $region5: #{transformer_classification_forward.1} parent=1 // pred_fallthru
      _
    // Predicated region
    $region6: #{transformer_classification_forward.1} parent=1 // pred_check
      _
    $region7: #{transformer_classification_forward.1} parent=1 // pred_check_branch
      %93 = sbr.rel (0) target = $region9
    $region8: #{transformer_classification_forward.1} parent=1 // pred_region
      _
    $region9: #{transformer_classification_forward.1} parent=1 // pred_fallthru
      _
    // Predicated region
    $region10: #{transformer_classification_forward.1} parent=1 // pred_check
      _
    $region11: #{transformer_classification_forward.1} parent=1 // pred_check_branch
      %95 = sbr.rel (0) target = $region13
    $region12: #{transformer_classification_forward.1} parent=1 // pred_region
      _
    $region13: #{transformer_classification_forward.1} parent=1 // pred_fallthru
      _
    // Predicated region
    $region14: #{transformer_classification_forward.1} parent=1 // pred_check
      _
    $region15: #{transformer_classification_forward.1} parent=1 // pred_check_branch
      %97 = sbr.rel (0) target = $region17
    $region16: #{transformer_classification_forward.1} parent=1 // pred_region
      _
    $region17: #{transformer_classification_forward.1} parent=1 // pred_fallthru
      _
    // Predicated region
    $region18: #{transformer_classification_forward.1} parent=1 // pred_check
      _
    $region19: #{transformer_classification_forward.1} parent=1 // pred_check_branch
      %99 = sbr.rel (0) target = $region21
    $region20: #{transformer_classification_forward.1} parent=1 // pred_region
      _
    $region21: #{transformer_classification_forward.1} parent=1 // pred_fallthru
      _
    // Predicated region
    $region22: #{transformer_classification_forward.1} parent=1 // pred_check
      _
    $region23: #{transformer_classification_forward.1} parent=1 // pred_check_branch
      %101 = sbr.rel (0) target = $region25
    $region24: #{transformer_classification_forward.1} parent=1 // pred_region
      _
    $region25: #{transformer_classification_forward.1} parent=1 // pred_fallthru
      _
    // Predicated region
    $region26: #{transformer_classification_forward.1} parent=1 // pred_check
      _
    $region27: #{transformer_classification_forward.1} parent=1 // pred_check_branch
      %103 = sbr.rel (0) target = $region29
    $region28: #{transformer_classification_forward.1} parent=1 // pred_region
      _
    $region29: #{transformer_classification_forward.1} parent=1 // pred_fallthru
      _
    // Predicated region
    $region30: #{transformer_classification_forward.1} parent=1 // pred_check
      _
    $region31: #{transformer_classification_forward.1} parent=1 // pred_check_branch
      %105 = sbr.rel (0) target = $region33
    $region32: #{transformer_classification_forward.1} parent=1 // pred_region
      _
    $region33: #{transformer_classification_forward.1} parent=1 // pred_fallthru
      _
    // Predicated region
    $region34: #{transformer_classification_forward.1} parent=1 // pred_check
      _
    $region35: #{transformer_classification_forward.1} parent=1 // pred_check_branch
      %107 = sbr.rel (0) target = $region37
    $region36: #{transformer_classification_forward.1} parent=1 // pred_region
      %109 = vsyncadd [#allocation3], 0
      %s110 = sshll.u32 %s17, 4
      %s111 = int_to_ptr.hbm [resolvable:$true] %s110
      %s112 = sshll.u32 [#allocation2], 4
      %s113 = int_to_ptr.vmem [resolvable:$true] %s112
      %118 = dma.hbm_to_vmem [thread:$0]  %s111, 2048, %s113, [#allocation3], 128, 128, 8
    $region37: #{transformer_classification_forward.1} parent=1 // pred_fallthru
      _
    // Predicated region
    $region38: #{transformer_classification_forward.1} parent=1 // pred_check
      _
    $region39: #{transformer_classification_forward.1} parent=1 // pred_check_branch
      %120 = sbr.rel (0) target = $region41
    $region40: #{transformer_classification_forward.1} parent=1 // pred_region
      _
    $region41: #{transformer_classification_forward.1} parent=1 // pred_fallthru
      _
    // Predicated region
    $region42: #{transformer_classification_forward.1} parent=1 // pred_check
      _
    $region43: #{transformer_classification_forward.1} parent=1 // pred_check_branch
      %122 = sbr.rel (0) target = $region45
    $region44: #{transformer_classification_forward.1} parent=1 // pred_region
      %124 = vsyncadd [#allocation6], 0
      %s125 = sshll.u32 %s21, 4
      %s126 = int_to_ptr.hbm [resolvable:$true] %s125
      %s127 = sshll.u32 [#allocation5], 4
      %s128 = int_to_ptr.vmem [resolvable:$true] %s127
      %133 = dma.hbm_to_vmem [thread:$0]  %s126, 2048, %s128, [#allocation6], 128, 128, 8
    $region45: #{transformer_classification_forward.1} parent=1 // pred_fallthru
      _
    // Predicated region
    $region46: #{transformer_classification_forward.1} parent=1 // pred_check
      _
    $region47: #{transformer_classification_forward.1} parent=1 // pred_check_branch
      %135 = sbr.rel (0) target = $region49
    $region48: #{transformer_classification_forward.1} parent=1 // pred_region
      _
    $region49: #{transformer_classification_forward.1} parent=1 // pred_fallthru
      _
    // Predicated region
    $region50: #{transformer_classification_forward.1} parent=1 // pred_check
      _
    $region51: #{transformer_classification_forward.1} parent=1 // pred_check_branch
      %137 = sbr.rel (0) target = $region53
    $region52: #{transformer_classification_forward.1} parent=1 // pred_region
      _
    $region53: #{transformer_classification_forward.1} parent=1 // pred_fallthru
      _
    // Predicated region
    $region54: #{transformer_classification_forward.1} parent=1 // pred_check
      _
    $region55: #{transformer_classification_forward.1} parent=1 // pred_check_branch
      %139 = sbr.rel (0) target = $region57
    $region56: #{transformer_classification_forward.1} parent=1 // pred_region
      _
    $region57: #{transformer_classification_forward.1} parent=1 // pred_fallthru
      _
    // Predicated region
    $region58: #{transformer_classification_forward.1} parent=1 // pred_check
      _
    $region59: #{transformer_classification_forward.1} parent=1 // pred_check_branch
      %141 = sbr.rel (0) target = $region61
    $region60: #{transformer_classification_forward.1} parent=1 // pred_region
      _
    $region61: #{transformer_classification_forward.1} parent=1 // pred_fallthru
      _
    // Predicated region
    $region62: #{transformer_classification_forward.1} parent=1 // pred_check
      _
    $region63: #{transformer_classification_forward.1} parent=1 // pred_check_branch
      %143 = sbr.rel (0) target = $region65
    $region64: #{transformer_classification_forward.1} parent=1 // pred_region
      _
    $region65: #{transformer_classification_forward.1} parent=1 // pred_fallthru
      _
    // Predicated region
    $region66: #{transformer_classification_forward.1} parent=1 // pred_check
      _
    $region67: #{transformer_classification_forward.1} parent=1 // pred_check_branch
      %145 = sbr.rel (0) target = $region69
    $region68: #{transformer_classification_forward.1} parent=1 // pred_region
      _
    $region69: #{transformer_classification_forward.1} parent=1 // pred_fallthru
      _
    // Predicated region
    $region70: #{transformer_classification_forward.1} parent=1 // pred_check
      _
    $region71: #{transformer_classification_forward.1} parent=1 // pred_check_branch
      %147 = sbr.rel (0) target = $region73
    $region72: #{transformer_classification_forward.1} parent=1 // pred_region
      _
    $region73: #{transformer_classification_forward.1} parent=1 // pred_fallthru
      _
    // Predicated region
    $region74: #{transformer_classification_forward.1} parent=1 // pred_check
      _
    $region75: #{transformer_classification_forward.1} parent=1 // pred_check_branch
      %149 = sbr.rel (0) target = $region77
    $region76: #{transformer_classification_forward.1} parent=1 // pred_region
      _
    $region77: #{transformer_classification_forward.1} parent=1 // pred_fallthru
      _
    // Predicated region
    $region78: #{transformer_classification_forward.1} parent=1 // pred_check
      _
    $region79: #{transformer_classification_forward.1} parent=1 // pred_check_branch
      %151 = sbr.rel (0) target = $region81
    $region80: #{transformer_classification_forward.1} parent=1 // pred_region
      _
    $region81: #{transformer_classification_forward.1} parent=1 // pred_fallthru
      _
    // Predicated region
    $region82: #{transformer_classification_forward.1} parent=1 // pred_check
      _
    $region83: #{transformer_classification_forward.1} parent=1 // pred_check_branch
      %153 = sbr.rel (0) target = $region85
    $region84: #{transformer_classification_forward.1} parent=1 // pred_region
      %155 = vsyncadd [#allocation6], 0
      %s156 = sshll.u32 %s41, 4
      %s157 = int_to_ptr.hbm [resolvable:$true] %s156
      %s158 = sshll.u32 [#allocation7], 4
      %s159 = int_to_ptr.vmem [resolvable:$true] %s158
      %164 = dma.hbm_to_vmem [thread:$0]  %s157, 2048, %s159, [#allocation6], 128, 128, 8
    $region85: #{transformer_classification_forward.1} parent=1 // pred_fallthru
      _
    // Predicated region
    $region86: #{transformer_classification_forward.1} parent=1 // pred_check
      _
    $region87: #{transformer_classification_forward.1} parent=1 // pred_check_branch
      %166 = sbr.rel (0) target = $region89
    $region88: #{transformer_classification_forward.1} parent=1 // pred_region
      _
    $region89: #{transformer_classification_forward.1} parent=1 // pred_fallthru
      _
    // Predicated region
    $region90: #{transformer_classification_forward.1} parent=1 // pred_check
      _
    $region91: #{transformer_classification_forward.1} parent=1 // pred_check_branch
      %168 = sbr.rel (0) target = $region93
    $region92: #{transformer_classification_forward.1} parent=1 // pred_region
      %170 = vsyncadd [#allocation9], 0
      %s171 = sshll.u32 %s45, 4
      %s172 = int_to_ptr.hbm [resolvable:$true] %s171
      %s173 = sshll.u32 [#allocation8], 4
      %s174 = int_to_ptr.vmem [resolvable:$true] %s173
      %179 = dma.hbm_to_vmem [thread:$0]  %s172, 2048, %s174, [#allocation9], 128, 128, 8
    $region93: #{transformer_classification_forward.1} parent=1 // pred_fallthru
      _
    // Predicated region
    $region94: #{transformer_classification_forward.1} parent=1 // pred_check
      _
    $region95: #{transformer_classification_forward.1} parent=1 // pred_check_branch
      %181 = sbr.rel (0) target = $region97
    $region96: #{transformer_classification_forward.1} parent=1 // pred_region
      _
    $region97: #{transformer_classification_forward.1} parent=1 // pred_fallthru
      _
    // Predicated region
    $region98: #{transformer_classification_forward.1} parent=1 // pred_check
      _
    $region99: #{transformer_classification_forward.1} parent=1 // pred_check_branch
      %183 = sbr.rel (0) target = $region101
    $region100: #{transformer_classification_forward.1} parent=1 // pred_region
      %185 = vsyncadd [#allocation9], 0
      %s186 = sshll.u32 %s49, 4
      %s187 = int_to_ptr.hbm [resolvable:$true] %s186
      %s188 = sshll.u32 [#allocation10], 4
      %s189 = int_to_ptr.vmem [resolvable:$true] %s188
      %194 = dma.hbm_to_vmem [thread:$0]  %s187, 2048, %s189, [#allocation9], 128, 128, 8
    $region101: #{transformer_classification_forward.1} parent=1 // pred_fallthru
      _
    // Predicated region
    $region102: #{transformer_classification_forward.1} parent=1 // pred_check
      _
    $region103: #{transformer_classification_forward.1} parent=1 // pred_check_branch
      %196 = sbr.rel (0) target = $region105
    $region104: #{transformer_classification_forward.1} parent=1 // pred_region
      _
    $region105: #{transformer_classification_forward.1} parent=1 // pred_fallthru
      _
    // Predicated region
    $region106: #{transformer_classification_forward.1} parent=1 // pred_check
      _
    $region107: #{transformer_classification_forward.1} parent=1 // pred_check_branch
      %198 = sbr.rel (0) target = $region109
    $region108: #{transformer_classification_forward.1} parent=1 // pred_region
      %200 = vsyncadd [#allocation12], 0
      %s201 = sshll.u32 %s53, 4
      %s202 = int_to_ptr.hbm [resolvable:$true] %s201
      %s203 = sshll.u32 [#allocation11], 4
      %s204 = int_to_ptr.vmem [resolvable:$true] %s203
      %209 = dma.hbm_to_vmem [thread:$0]  %s202, 2048, %s204, [#allocation12], 128, 128, 8
    $region109: #{transformer_classification_forward.1} parent=1 // pred_fallthru
      _
    // Predicated region
    $region110: #{transformer_classification_forward.1} parent=1 // pred_check
      _
    $region111: #{transformer_classification_forward.1} parent=1 // pred_check_branch
      %211 = sbr.rel (0) target = $region113
    $region112: #{transformer_classification_forward.1} parent=1 // pred_region
      _
    $region113: #{transformer_classification_forward.1} parent=1 // pred_fallthru
      _
    // Predicated region
    $region114: #{transformer_classification_forward.1} parent=1 // pred_check
      _
    $region115: #{transformer_classification_forward.1} parent=1 // pred_check_branch
      %213 = sbr.rel (0) target = $region117
    $region116: #{transformer_classification_forward.1} parent=1 // pred_region
      _
    $region117: #{transformer_classification_forward.1} parent=1 // pred_fallthru
      _
    // Predicated region
    $region118: #{transformer_classification_forward.1} parent=1 // pred_check
      _
    $region119: #{transformer_classification_forward.1} parent=1 // pred_check_branch
      %215 = sbr.rel (0) target = $region121
    $region120: #{transformer_classification_forward.1} parent=1 // pred_region
      _
    $region121: #{transformer_classification_forward.1} parent=1 // pred_fallthru
      _
    // Predicated region
    $region122: #{transformer_classification_forward.1} parent=1 // pred_check
      _
    $region123: #{transformer_classification_forward.1} parent=1 // pred_check_branch
      %217 = sbr.rel (0) target = $region125
    $region124: #{transformer_classification_forward.1} parent=1 // pred_region
      %219 = vsyncadd [#allocation12], 0
      %s220 = sshll.u32 %s61, 4
      %s221 = int_to_ptr.hbm [resolvable:$true] %s220
      %s222 = sshll.u32 [#allocation13], 4
      %s223 = int_to_ptr.vmem [resolvable:$true] %s222
      %228 = dma.hbm_to_vmem [thread:$0]  %s221, 4096, %s223, [#allocation12], 256, 256, 16
    $region125: #{transformer_classification_forward.1} parent=1 // pred_fallthru
      _
    // Predicated region
    $region126: #{transformer_classification_forward.1} parent=1 // pred_check
      _
    $region127: #{transformer_classification_forward.1} parent=1 // pred_check_branch
      %230 = sbr.rel (0) target = $region129
    $region128: #{transformer_classification_forward.1} parent=1 // pred_region
      _
    $region129: #{transformer_classification_forward.1} parent=1 // pred_fallthru
      _
    // Predicated region
    $region130: #{transformer_classification_forward.1} parent=1 // pred_check
      _
    $region131: #{transformer_classification_forward.1} parent=1 // pred_check_branch
      %232 = sbr.rel (0) target = $region133
    $region132: #{transformer_classification_forward.1} parent=1 // pred_region
      %234 = vsyncadd [#allocation15], 0
      %s235 = sshll.u32 %s65, 4
      %s236 = int_to_ptr.hbm [resolvable:$true] %s235
      %s237 = sshll.u32 [#allocation14], 4
      %s238 = int_to_ptr.vmem [resolvable:$true] %s237
      %243 = dma.hbm_to_vmem [thread:$0]  %s236, 4096, %s238, [#allocation15], 128, 128, 8
    $region133: #{transformer_classification_forward.1} parent=1 // pred_fallthru
      _
    // Predicated region
    $region134: #{transformer_classification_forward.1} parent=1 // pred_check
      _
    $region135: #{transformer_classification_forward.1} parent=1 // pred_check_branch
      %245 = sbr.rel (0) target = $region137
    $region136: #{transformer_classification_forward.1} parent=1 // pred_region
      _
    $region137: #{transformer_classification_forward.1} parent=1 // pred_fallthru
      _
    // Predicated region
    $region138: #{transformer_classification_forward.1} parent=1 // pred_check
      _
    $region139: #{transformer_classification_forward.1} parent=1 // pred_check_branch
      %247 = sbr.rel (0) target = $region141
    $region140: #{transformer_classification_forward.1} parent=1 // pred_region
      _
    $region141: #{transformer_classification_forward.1} parent=1 // pred_fallthru
      _
    // Predicated region
    $region142: #{transformer_classification_forward.1} parent=1 // pred_check
      _
    $region143: #{transformer_classification_forward.1} parent=1 // pred_check_branch
      %249 = sbr.rel (0) target = $region145
    $region144: #{transformer_classification_forward.1} parent=1 // pred_region
      _
    $region145: #{transformer_classification_forward.1} parent=1 // pred_fallthru
      _
    // Predicated region
    $region146: #{transformer_classification_forward.1} parent=1 // pred_check
      _
    $region147: #{transformer_classification_forward.1} parent=1 // pred_check_branch
      %251 = sbr.rel (0) target = $region149
    $region148: #{transformer_classification_forward.1} parent=1 // pred_region
      %253 = dma.done [#allocation3], 2048
    $region149: #{transformer_classification_forward.1} parent=1 // pred_fallthru
      _
    // Predicated region
    $region150: #{transformer_classification_forward.1} parent=1 // pred_check
      _
    $region151: #{transformer_classification_forward.1} parent=1 // pred_check_branch
      %255 = sbr.rel (0) target = $region153
    $region152: #{transformer_classification_forward.1} parent=1 // pred_region
      %257 = dma.done [#allocation6], 2048
    $region153: #{transformer_classification_forward.1} parent=1 // pred_fallthru
      _
    // Predicated region
    $region154: #{transformer_classification_forward.1} parent=1 // pred_check
      _
    $region155: #{transformer_classification_forward.1} parent=1 // pred_check_branch
      %259 = sbr.rel (0) target = $region157
    $region156: #{transformer_classification_forward.1} parent=1 // pred_region
      %261 = dma.done [#allocation6], 2048
    $region157: #{transformer_classification_forward.1} parent=1 // pred_fallthru
      _
    // Predicated region
    $region158: #{transformer_classification_forward.1} parent=1 // pred_check
      _
    $region159: #{transformer_classification_forward.1} parent=1 // pred_check_branch
      %263 = sbr.rel (0) target = $region161
    $region160: #{transformer_classification_forward.1} parent=1 // pred_region
      %265 = dma.done [#allocation9], 2048
    $region161: #{transformer_classification_forward.1} parent=1 // pred_fallthru
      _
    // Predicated region
    $region162: #{transformer_classification_forward.1} parent=1 // pred_check
      _
    $region163: #{transformer_classification_forward.1} parent=1 // pred_check_branch
      %267 = sbr.rel (0) target = $region165
    $region164: #{transformer_classification_forward.1} parent=1 // pred_region
      %269 = dma.done [#allocation9], 2048
    $region165: #{transformer_classification_forward.1} parent=1 // pred_fallthru
      _
    // Predicated region
    $region166: #{transformer_classification_forward.1} parent=1 // pred_check
      _
    $region167: #{transformer_classification_forward.1} parent=1 // pred_check_branch
      %271 = sbr.rel (0) target = $region169
    $region168: #{transformer_classification_forward.1} parent=1 // pred_region
      %273 = dma.done [#allocation12], 2048
    $region169: #{transformer_classification_forward.1} parent=1 // pred_fallthru
      _
    // Predicated region
    $region170: #{transformer_classification_forward.1} parent=1 // pred_check
      _
    $region171: #{transformer_classification_forward.1} parent=1 // pred_check_branch
      %275 = sbr.rel (0) target = $region173
    $region172: #{transformer_classification_forward.1} parent=1 // pred_region
      %277 = dma.done [#allocation12], 4096
    $region173: #{transformer_classification_forward.1} parent=1 // pred_fallthru
      _
    // Predicated region
    $region174: #{transformer_classification_forward.1} parent=1 // pred_check
      _
    $region175: #{transformer_classification_forward.1} parent=1 // pred_check_branch
      %279 = sbr.rel (0) target = $region177
    $region176: #{transformer_classification_forward.1} parent=1 // pred_region
      %281 = dma.done [#allocation15], 4096
    $region177: #{transformer_classification_forward.1} parent=1 // pred_fallthru
      _
    %v283 = vld [vmem:[%s3] sm:$0xff]
    %v284 = vld [vmem:[%s3 + $0x8] sm:$0xff]
    %v285 = vld [vmem:[%s1] sm:$0xff]
    %v286 = vld [vmem:[%s1 + $0x8] sm:$0xff]
    %v287 = vld [vmem:[%s5] sm:$0x1]
    %v288 = vld [vmem:[%s7] sm:$0x1]
    %v289 = vld [vmem:[%s9] sm:$0xff]
    %v290 = vld [vmem:[%s9 + $0x8] sm:$0xff]
    %v291 = vld [vmem:[%s9 + $0x10] sm:$0xff]
    %v292 = vld [vmem:[%s9 + $0x18] sm:$0xff]
    %v293 = vld [vmem:[%s9 + $0x20] sm:$0xff]
    %v294 = vld [vmem:[%s9 + $0x28] sm:$0xff]
    %v295 = vld [vmem:[%s9 + $0x30] sm:$0xff]
    %v296 = vld [vmem:[%s9 + $0x38] sm:$0xff]
    %v297 = vld [vmem:[%s9 + $0x40] sm:$0xff]
    %v298 = vld [vmem:[%s9 + $0x48] sm:$0xff]
    %v299 = vld [vmem:[%s9 + $0x50] sm:$0xff]
    %v300 = vld [vmem:[%s9 + $0x58] sm:$0xff]
    %v301 = vld [vmem:[%s9 + $0x60] sm:$0xff]
    %v302 = vld [vmem:[%s9 + $0x68] sm:$0xff]
    %v303 = vld [vmem:[%s9 + $0x70] sm:$0xff]
    %v304 = vld [vmem:[%s9 + $0x78] sm:$0xff]
    %v305 = vld [vmem:[%s11] sm:$0x1]
    %v306 = vld [vmem:[%s13] sm:$0xff]
    %v307 = vld [vmem:[%s13 + $0x8] sm:$0xff]
    %v308 = vld [vmem:[%s13 + $0x10] sm:$0xff]
    %v309 = vld [vmem:[%s13 + $0x18] sm:$0xff]
    %v310 = vld [vmem:[%s13 + $0x20] sm:$0xff]
    %v311 = vld [vmem:[%s13 + $0x28] sm:$0xff]
    %v312 = vld [vmem:[%s13 + $0x30] sm:$0xff]
    %v313 = vld [vmem:[%s13 + $0x38] sm:$0xff]
    %v314 = vld [vmem:[%s13 + $0x40] sm:$0xff]
    %v315 = vld [vmem:[%s13 + $0x48] sm:$0xff]
    %v316 = vld [vmem:[%s13 + $0x50] sm:$0xff]
    %v317 = vld [vmem:[%s13 + $0x58] sm:$0xff]
    %v318 = vld [vmem:[%s13 + $0x60] sm:$0xff]
    %v319 = vld [vmem:[%s13 + $0x68] sm:$0xff]
    %v320 = vld [vmem:[%s13 + $0x70] sm:$0xff]
    %v321 = vld [vmem:[%s13 + $0x78] sm:$0xff]
    %v322 = vld [vmem:[%s15] sm:$0x1]
    %v323 = vld [vmem:[#allocation2] sm:$0xff]
    %v324 = vld [vmem:[#allocation2 + $0x8] sm:$0xff]
    %v325 = vld [vmem:[#allocation2 + $0x10] sm:$0xff]
    %v326 = vld [vmem:[#allocation2 + $0x18] sm:$0xff]
    %v327 = vld [vmem:[#allocation2 + $0x20] sm:$0xff]
    %v328 = vld [vmem:[#allocation2 + $0x28] sm:$0xff]
    %v329 = vld [vmem:[#allocation2 + $0x30] sm:$0xff]
    %v330 = vld [vmem:[#allocation2 + $0x38] sm:$0xff]
    %v331 = vld [vmem:[#allocation2 + $0x40] sm:$0xff]
    %v332 = vld [vmem:[#allocation2 + $0x48] sm:$0xff]
    %v333 = vld [vmem:[#allocation2 + $0x50] sm:$0xff]
    %v334 = vld [vmem:[#allocation2 + $0x58] sm:$0xff]
    %v335 = vld [vmem:[#allocation2 + $0x60] sm:$0xff]
    %v336 = vld [vmem:[#allocation2 + $0x68] sm:$0xff]
    %v337 = vld [vmem:[#allocation2 + $0x70] sm:$0xff]
    %v338 = vld [vmem:[#allocation2 + $0x78] sm:$0xff]
    %v339 = vld [vmem:[%s19] sm:$0x1]
    %v340 = vld [vmem:[#allocation5] sm:$0xff]
    %v341 = vld [vmem:[#allocation5 + $0x8] sm:$0xff]
    %v342 = vld [vmem:[#allocation5 + $0x10] sm:$0xff]
    %v343 = vld [vmem:[#allocation5 + $0x18] sm:$0xff]
    %v344 = vld [vmem:[#allocation5 + $0x20] sm:$0xff]
    %v345 = vld [vmem:[#allocation5 + $0x28] sm:$0xff]
    %v346 = vld [vmem:[#allocation5 + $0x30] sm:$0xff]
    %v347 = vld [vmem:[#allocation5 + $0x38] sm:$0xff]
    %v348 = vld [vmem:[#allocation5 + $0x40] sm:$0xff]
    %v349 = vld [vmem:[#allocation5 + $0x48] sm:$0xff]
    %v350 = vld [vmem:[#allocation5 + $0x50] sm:$0xff]
    %v351 = vld [vmem:[#allocation5 + $0x58] sm:$0xff]
    %v352 = vld [vmem:[#allocation5 + $0x60] sm:$0xff]
    %v353 = vld [vmem:[#allocation5 + $0x68] sm:$0xff]
    %v354 = vld [vmem:[#allocation5 + $0x70] sm:$0xff]
    %v355 = vld [vmem:[#allocation5 + $0x78] sm:$0xff]
    %v356 = vld [vmem:[%s23] sm:$0x1]
    %v357 = vld [vmem:[%s25] sm:$0x1]
    %v358 = vld [vmem:[%s27] sm:$0x1]
    %v359 = vld [vmem:[%s29] sm:$0xff]
    %v360 = vld [vmem:[%s29 + $0x8] sm:$0xff]
    %v361 = vld [vmem:[%s29 + $0x10] sm:$0xff]
    %v362 = vld [vmem:[%s29 + $0x18] sm:$0xff]
    %v363 = vld [vmem:[%s29 + $0x20] sm:$0xff]
    %v364 = vld [vmem:[%s29 + $0x28] sm:$0xff]
    %v365 = vld [vmem:[%s29 + $0x30] sm:$0xff]
    %v366 = vld [vmem:[%s29 + $0x38] sm:$0xff]
    %v367 = vld [vmem:[%s29 + $0x40] sm:$0xff]
    %v368 = vld [vmem:[%s29 + $0x48] sm:$0xff]
    %v369 = vld [vmem:[%s29 + $0x50] sm:$0xff]
    %v370 = vld [vmem:[%s29 + $0x58] sm:$0xff]
    %v371 = vld [vmem:[%s29 + $0x60] sm:$0xff]
    %v372 = vld [vmem:[%s29 + $0x68] sm:$0xff]
    %v373 = vld [vmem:[%s29 + $0x70] sm:$0xff]
    %v374 = vld [vmem:[%s29 + $0x78] sm:$0xff]
    %v375 = vld [vmem:[%s29 + $0x80] sm:$0xff]
    %v376 = vld [vmem:[%s29 + $0x88] sm:$0xff]
    %v377 = vld [vmem:[%s29 + $0x90] sm:$0xff]
    %v378 = vld [vmem:[%s29 + $0x98] sm:$0xff]
    %v379 = vld [vmem:[%s29 + $0xa0] sm:$0xff]
    %v380 = vld [vmem:[%s29 + $0xa8] sm:$0xff]
    %v381 = vld [vmem:[%s29 + $0xb0] sm:$0xff]
    %v382 = vld [vmem:[%s29 + $0xb8] sm:$0xff]
    %v383 = vld [vmem:[%s29 + $0xc0] sm:$0xff]
    %v384 = vld [vmem:[%s29 + $0xc8] sm:$0xff]
    %v385 = vld [vmem:[%s29 + $0xd0] sm:$0xff]
    %v386 = vld [vmem:[%s29 + $0xd8] sm:$0xff]
    %v387 = vld [vmem:[%s29 + $0xe0] sm:$0xff]
    %v388 = vld [vmem:[%s29 + $0xe8] sm:$0xff]
    %v389 = vld [vmem:[%s29 + $0xf0] sm:$0xff]
    %v390 = vld [vmem:[%s29 + $0xf8] sm:$0xff]
    %v391 = vld [vmem:[%s31] sm:$0x3]
    %v392 = vld [vmem:[%s33] sm:$0xff]
    %v393 = vld [vmem:[%s33 + $0x8] sm:$0xff]
    %v394 = vld [vmem:[%s33 + $0x10] sm:$0xff]
    %v395 = vld [vmem:[%s33 + $0x18] sm:$0xff]
    %v396 = vld [vmem:[%s33 + $0x20] sm:$0xff]
    %v397 = vld [vmem:[%s33 + $0x28] sm:$0xff]
    %v398 = vld [vmem:[%s33 + $0x30] sm:$0xff]
    %v399 = vld [vmem:[%s33 + $0x38] sm:$0xff]
    %v400 = vld [vmem:[%s33 + $0x40] sm:$0xff]
    %v401 = vld [vmem:[%s33 + $0x48] sm:$0xff]
    %v402 = vld [vmem:[%s33 + $0x50] sm:$0xff]
    %v403 = vld [vmem:[%s33 + $0x58] sm:$0xff]
    %v404 = vld [vmem:[%s33 + $0x60] sm:$0xff]
    %v405 = vld [vmem:[%s33 + $0x68] sm:$0xff]
    %v406 = vld [vmem:[%s33 + $0x70] sm:$0xff]
    %v407 = vld [vmem:[%s33 + $0x78] sm:$0xff]
    %v408 = vld [vmem:[%s33 + $0x80] sm:$0xff]
    %v409 = vld [vmem:[%s33 + $0x88] sm:$0xff]
    %v410 = vld [vmem:[%s33 + $0x90] sm:$0xff]
    %v411 = vld [vmem:[%s33 + $0x98] sm:$0xff]
    %v412 = vld [vmem:[%s33 + $0xa0] sm:$0xff]
    %v413 = vld [vmem:[%s33 + $0xa8] sm:$0xff]
    %v414 = vld [vmem:[%s33 + $0xb0] sm:$0xff]
    %v415 = vld [vmem:[%s33 + $0xb8] sm:$0xff]
    %v416 = vld [vmem:[%s33 + $0xc0] sm:$0xff]
    %v417 = vld [vmem:[%s33 + $0xc8] sm:$0xff]
    %v418 = vld [vmem:[%s33 + $0xd0] sm:$0xff]
    %v419 = vld [vmem:[%s33 + $0xd8] sm:$0xff]
    %v420 = vld [vmem:[%s33 + $0xe0] sm:$0xff]
    %v421 = vld [vmem:[%s33 + $0xe8] sm:$0xff]
    %v422 = vld [vmem:[%s33 + $0xf0] sm:$0xff]
    %v423 = vld [vmem:[%s33 + $0xf8] sm:$0xff]
    %v424 = vld [vmem:[%s35] sm:$0x1]
    %425 = vadd.xlane.f32.xlu0 %v285
    %v426 = vpop.xlane.xlu0 %425
    %427 = vadd.xlane.f32.xlu0 %v286
    %v428 = vpop.xlane.xlu0 %427
    %v429 = vrcp.pop 128.0
    %v430 = vmul.f32 128.0, %v429
    %v431 = vsub.f32 1.0, %v430
    %v432 = vmul.f32 %v429, %v431
    %v433 = vadd.f32 %v429, %v432
    %vm434 = vweird.f32 %v429
    %v435 = vsel %vm434, %v429, %v433
    %v436 = vmul.f32 %v426, %v435
    %v437 = vmul.f32 %v428, %v435
    %v438 = vsub.f32 %v285, %v436
    %v439 = vsub.f32 %v286, %v437
    %v440 = vmul.f32 %v438, %v438
    %v441 = vmul.f32 %v439, %v439
    %442 = vadd.xlane.f32.xlu0 %v440
    %v443 = vpop.xlane.xlu0 %442
    %444 = vadd.xlane.f32.xlu0 %v441
    %v445 = vpop.xlane.xlu0 %444
    %v446 = vmul.f32 %v443, %v435
    %v447 = vmul.f32 %v445, %v435
    %v448 = vadd.f32 %v446, 1e-05
    %v449 = vadd.f32 %v447, 1e-05
    %v450 = vrsqrt.pop %v448
    %v451 = vmul.f32 %v450, %v448
    %v452 = vmul.f32 %v451, %v450
    %v453 = vmul.f32 0.5, %v452
    %v454 = vsub.f32 1.5, %v453
    %v455 = vmul.f32 %v450, %v454
    %vm456 = vweird.f32 %v448
    %vm457 = vweird.f32 %v450
    %vm458 = vmor %vm456, %vm457
    %v459 = vsel %vm458, %v450, %v455
    %v460 = vrsqrt.pop %v449
    %v461 = vmul.f32 %v460, %v449
    %v462 = vmul.f32 %v461, %v460
    %v463 = vmul.f32 0.5, %v462
    %v464 = vsub.f32 1.5, %v463
    %v465 = vmul.f32 %v460, %v464
    %vm466 = vweird.f32 %v449
    %vm467 = vweird.f32 %v460
    %vm468 = vmor %vm466, %vm467
    %v469 = vsel %vm468, %v460, %v465
    %v470 = vmul.f32 %v438, %v459
    %v471 = vmul.f32 %v439, %v469
    %v473 = vperm.slane %v287, 0
    %v475 = vmul.f32 %v470, %v473
    %v476 = vmul.f32 %v471, %v473
    %v478 = vperm.slane %v288, 0
    %v480 = vadd.f32 %v475, %v478
    %v481 = vadd.f32 %v476, %v478
    %v482 = vpack.c.bf16 %v481, %v480
    %v483 = vpack.c.bf16 %v290, %v289
    %v484 = vpack.c.bf16 %v292, %v291
    %v485 = vpack.c.bf16 %v294, %v293
    %v486 = vpack.c.bf16 %v296, %v295
    %v487 = vpack.c.bf16 %v298, %v297
    %v488 = vpack.c.bf16 %v300, %v299
    %v489 = vpack.c.bf16 %v302, %v301
    %v490 = vpack.c.bf16 %v304, %v303
    %v492 = vperm.slane %v305, 0
    %494 = vmatpush.bf16.msra.mxu0 %v490
    %495 = vmatpush.bf16.msra.mxu0 %v489
    %496 = vmatpush.bf16.msra.mxu0 %v488
    %497 = vmatpush.bf16.msra.mxu0 %v487
    %498 = vmatpush.bf16.msra.mxu0 %v486
    %499 = vmatpush.bf16.msra.mxu0 %v485
    %500 = vmatpush.bf16.msra.mxu0 %v484
    %501 = vmatpush.bf16.msra.mxu0 %v483
    %502 = vmatmul.bf16.gmra.mxu0 %v482
    %v503 = vpop.f32.mrf.mxu0
    %v504 = vadd.f32 %v492, %v503
    %v505 = vpop.f32.mrf.mxu0
    %v506 = vadd.f32 %v492, %v505
    %507 = vdwg.mxu0
    %v508 = vpack.c.bf16 %v307, %v306
    %v509 = vpack.c.bf16 %v309, %v308
    %v510 = vpack.c.bf16 %v311, %v310
    %v511 = vpack.c.bf16 %v313, %v312
    %v512 = vpack.c.bf16 %v315, %v314
    %v513 = vpack.c.bf16 %v317, %v316
    %v514 = vpack.c.bf16 %v319, %v318
    %v515 = vpack.c.bf16 %v321, %v320
    %v517 = vperm.slane %v322, 0
    %519 = vmatpush.bf16.msra.mxu0 %v515
    %520 = vmatpush.bf16.msra.mxu0 %v514
    %521 = vmatpush.bf16.msra.mxu0 %v513
    %522 = vmatpush.bf16.msra.mxu0 %v512
    %523 = vmatpush.bf16.msra.mxu0 %v511
    %524 = vmatpush.bf16.msra.mxu0 %v510
    %525 = vmatpush.bf16.msra.mxu0 %v509
    %526 = vmatpush.bf16.msra.mxu0 %v508
    %527 = vmatmul.bf16.gmra.mxu0 %v482
    %v528 = vpop.f32.mrf.mxu0
    %v529 = vadd.f32 %v517, %v528
    %v530 = vpop.f32.mrf.mxu0
    %v531 = vadd.f32 %v517, %v530
    %532 = vdwg.mxu0
    %v533 = vpack.c.bf16 %v324, %v323
    %v534 = vpack.c.bf16 %v326, %v325
    %v535 = vpack.c.bf16 %v328, %v327
    %v536 = vpack.c.bf16 %v330, %v329
    %v537 = vpack.c.bf16 %v332, %v331
    %v538 = vpack.c.bf16 %v334, %v333
    %v539 = vpack.c.bf16 %v336, %v335
    %v540 = vpack.c.bf16 %v338, %v337
    %v542 = vperm.slane %v339, 0
    %544 = vmatpush.bf16.msra.mxu0 %v540
    %545 = vmatpush.bf16.msra.mxu0 %v539
    %546 = vmatpush.bf16.msra.mxu0 %v538
    %547 = vmatpush.bf16.msra.mxu0 %v537
    %548 = vmatpush.bf16.msra.mxu0 %v536
    %549 = vmatpush.bf16.msra.mxu0 %v535
    %550 = vmatpush.bf16.msra.mxu0 %v534
    %551 = vmatpush.bf16.msra.mxu0 %v533
    %552 = vmatmul.bf16.gmra.mxu0 %v482
    %v553 = vpop.f32.mrf.mxu0
    %v554 = vadd.f32 %v542, %v553
    %v555 = vpop.f32.mrf.mxu0
    %v556 = vadd.f32 %v542, %v555
    %557 = vdwg.mxu0
    %v558 = vpack.c.bf16 %v506, %v504
    %v559 = vpack.c.bf16 %v531, %v529
    %560 = vmatpush.bf16.xpose.msra.mxu0 0
    %561 = vmatpush.bf16.xpose.msra.mxu0 0
    %562 = vmatpush.bf16.xpose.msra.mxu0 0
    %563 = vmatpush.bf16.xpose.msra.mxu0 0
    %564 = vmatpush.bf16.xpose.msra.mxu0 0
    %565 = vmatpush.bf16.xpose.msra.mxu0 0
    %566 = vmatpush.bf16.xpose.msra.mxu0 0
    %567 = vmatpush.bf16.xpose.msra.mxu0 %v559
    %568 = vmatmul.bf16.gmra.mxu0 %v558
    %v569 = vpop.f32.mrf.mxu0
    %v570 = vadd.f32 0.0, %v569
    %v571 = vpop.f32.mrf.mxu0
    %v572 = vadd.f32 0.0, %v571
    %573 = vdwg.mxu0
    %v574 = vmul.f32 %v570, 0.088388346
    %v575 = vmul.f32 %v572, 0.088388346
    %vm576 = vcmp.eq.f32.partialorder %v283, 0.0
    %vm577 = vcmp.eq.f32.partialorder %v284, 0.0
    %v578 = vsel %vm576, -1e+09, %v574
    %v579 = vsel %vm577, -1e+09, %v575
    %vm580 = vcmask 130048
    %v581 = vsel %vm580, %v578, -inf
    %582 = vmax.xlane.f32.xlu0 %v581
    %v583 = vpop.xlane.xlu0 %582
    %v584 = vsel %vm580, %v579, -inf
    %585 = vmax.xlane.f32.xlu0 %v584
    %v586 = vpop.xlane.xlu0 %585
    %v587 = vsub.f32 %v578, %v583
    %v588 = vsub.f32 %v579, %v586
    %v589 = vmul.f32 %v587, 1.442695
    %v590 = vpow.pop %v589
    %v591 = vmul.f32 %v588, 1.442695
    %v592 = vpow.pop %v591
    %v593 = vsel %vm580, %v590, 0.0
    %594 = vadd.xlane.f32.xlu0 %v593
    %v595 = vpop.xlane.xlu0 %594
    %v596 = vsel %vm580, %v592, 0.0
    %597 = vadd.xlane.f32.xlu0 %v596
    %v598 = vpop.xlane.xlu0 %597
    %v599 = vrcp.pop %v595
    %v600 = vrcp.pop %v598
    %v601 = vmul.f32 %v590, %v599
    %v602 = vmul.f32 %v592, %v600
    %v603 = vpack.c.bf16 %v602, %v601
    %v604 = vpack.c.bf16 %v556, %v554
    %v606 = vsel %vm580, %v603, 0
    %608 = vmatpush.bf16.msra.mxu0 0
    %609 = vmatpush.bf16.msra.mxu0 0
    %610 = vmatpush.bf16.msra.mxu0 0
    %611 = vmatpush.bf16.msra.mxu0 0
    %612 = vmatpush.bf16.msra.mxu0 0
    %613 = vmatpush.bf16.msra.mxu0 0
    %614 = vmatpush.bf16.msra.mxu0 0
    %615 = vmatpush.bf16.msra.mxu0 %v604
    %616 = vmatmul.bf16.gmra.mxu0 %v606
    %v617 = vpop.f32.mrf.mxu0
    %v618 = vadd.f32 0.0, %v617
    %v619 = vpop.f32.mrf.mxu0
    %v620 = vadd.f32 0.0, %v619
    %621 = vdwg.mxu0
    %v622 = vpack.c.bf16 %v620, %v618
    %v623 = vpack.c.bf16 %v341, %v340
    %v624 = vpack.c.bf16 %v343, %v342
    %v625 = vpack.c.bf16 %v345, %v344
    %v626 = vpack.c.bf16 %v347, %v346
    %v627 = vpack.c.bf16 %v349, %v348
    %v628 = vpack.c.bf16 %v351, %v350
    %v629 = vpack.c.bf16 %v353, %v352
    %v630 = vpack.c.bf16 %v355, %v354
    %v632 = vperm.slane %v356, 0
    %634 = vmatpush.bf16.msra.mxu0 %v630
    %635 = vmatpush.bf16.msra.mxu0 %v629
    %636 = vmatpush.bf16.msra.mxu0 %v628
    %637 = vmatpush.bf16.msra.mxu0 %v627
    %638 = vmatpush.bf16.msra.mxu0 %v626
    %639 = vmatpush.bf16.msra.mxu0 %v625
    %640 = vmatpush.bf16.msra.mxu0 %v624
    %641 = vmatpush.bf16.msra.mxu0 %v623
    %642 = vmatmul.bf16.gmra.mxu0 %v622
    %v643 = vpop.f32.mrf.mxu0
    %v644 = vadd.f32 %v632, %v643
    %v645 = vpop.f32.mrf.mxu0
    %v646 = vadd.f32 %v632, %v645
    %647 = vdwg.mxu0
    %v648 = vadd.f32 %v644, %v644
    %v649 = vadd.f32 %v646, %v646
    %650 = vadd.xlane.f32.xlu0 %v648
    %v651 = vpop.xlane.xlu0 %650
    %652 = vadd.xlane.f32.xlu0 %v649
    %v653 = vpop.xlane.xlu0 %652
    %v654 = vmul.f32 %v651, %v435
    %v655 = vmul.f32 %v653, %v435
    %v656 = vsub.f32 %v648, %v654
    %v657 = vsub.f32 %v649, %v655
    %v658 = vmul.f32 %v656, %v656
    %v659 = vmul.f32 %v657, %v657
    %660 = vadd.xlane.f32.xlu0 %v658
    %v661 = vpop.xlane.xlu0 %660
    %662 = vadd.xlane.f32.xlu0 %v659
    %v663 = vpop.xlane.xlu0 %662
    %v664 = vmul.f32 %v661, %v435
    %v665 = vmul.f32 %v663, %v435
    %v666 = vadd.f32 %v664, 1e-05
    %v667 = vadd.f32 %v665, 1e-05
    %v668 = vrsqrt.pop %v666
    %v669 = vmul.f32 %v668, %v666
    %v670 = vmul.f32 %v669, %v668
    %v671 = vmul.f32 0.5, %v670
    %v672 = vsub.f32 1.5, %v671
    %v673 = vmul.f32 %v668, %v672
    %vm674 = vweird.f32 %v666
    %vm675 = vweird.f32 %v668
    %vm676 = vmor %vm674, %vm675
    %v677 = vsel %vm676, %v668, %v673
    %v678 = vrsqrt.pop %v667
    %v679 = vmul.f32 %v678, %v667
    %v680 = vmul.f32 %v679, %v678
    %v681 = vmul.f32 0.5, %v680
    %v682 = vsub.f32 1.5, %v681
    %v683 = vmul.f32 %v678, %v682
    %vm684 = vweird.f32 %v667
    %vm685 = vweird.f32 %v678
    %vm686 = vmor %vm684, %vm685
    %v687 = vsel %vm686, %v678, %v683
    %v688 = vmul.f32 %v656, %v677
    %v689 = vmul.f32 %v657, %v687
    %v691 = vperm.slane %v357, 0
    %v693 = vmul.f32 %v688, %v691
    %v694 = vmul.f32 %v689, %v691
    %v696 = vperm.slane %v358, 0
    %v698 = vadd.f32 %v693, %v696
    %v699 = vadd.f32 %v694, %v696
    %v700 = vpack.c.bf16 %v699, %v698
    %v701 = vpack.c.bf16 %v361, %v359
    %v702 = vpack.c.bf16 %v362, %v360
    %v703 = vpack.c.bf16 %v365, %v363
    %v704 = vpack.c.bf16 %v366, %v364
    %v705 = vpack.c.bf16 %v369, %v367
    %v706 = vpack.c.bf16 %v370, %v368
    %v707 = vpack.c.bf16 %v373, %v371
    %v708 = vpack.c.bf16 %v374, %v372
    %v709 = vpack.c.bf16 %v377, %v375
    %v710 = vpack.c.bf16 %v378, %v376
    %v711 = vpack.c.bf16 %v381, %v379
    %v712 = vpack.c.bf16 %v382, %v380
    %v713 = vpack.c.bf16 %v385, %v383
    %v714 = vpack.c.bf16 %v386, %v384
    %v715 = vpack.c.bf16 %v389, %v387
    %v716 = vpack.c.bf16 %v390, %v388
    %v718 = vperm.slane %v391, 0
    %v719 = vperm.slane %v391, 1
    %722 = vmatpush.bf16.msra.mxu0 %v715
    %723 = vmatpush.bf16.msra.mxu0 %v713
    %724 = vmatpush.bf16.msra.mxu0 %v711
    %725 = vmatpush.bf16.msra.mxu0 %v709
    %726 = vmatpush.bf16.msra.mxu0 %v707
    %727 = vmatpush.bf16.msra.mxu0 %v705
    %728 = vmatpush.bf16.msra.mxu0 %v703
    %729 = vmatpush.bf16.msra.mxu0 %v701
    %730 = vmatmul.bf16.gmra.mxu0 %v700
    %v731 = vpop.f32.mrf.mxu0
    %v732 = vadd.f32 %v718, %v731
    %v733 = vpop.f32.mrf.mxu0
    %v734 = vadd.f32 %v718, %v733
    %735 = vdwg.mxu0
    %736 = vmatpush.bf16.msra.mxu0 %v716
    %737 = vmatpush.bf16.msra.mxu0 %v714
    %738 = vmatpush.bf16.msra.mxu0 %v712
    %739 = vmatpush.bf16.msra.mxu0 %v710
    %740 = vmatpush.bf16.msra.mxu0 %v708
    %741 = vmatpush.bf16.msra.mxu0 %v706
    %742 = vmatpush.bf16.msra.mxu0 %v704
    %743 = vmatpush.bf16.msra.mxu0 %v702
    %744 = vmatmul.bf16.gmra.mxu0 %v700
    %v745 = vpop.f32.mrf.mxu0
    %v746 = vadd.f32 %v719, %v745
    %v747 = vpop.f32.mrf.mxu0
    %v748 = vadd.f32 %v719, %v747
    %749 = vdwg.mxu0
    %v750 = vmax.f32 %v732, 0.0
    %v751 = vmax.f32 %v746, 0.0
    %v752 = vmax.f32 %v734, 0.0
    %v753 = vmax.f32 %v748, 0.0
    %v754 = vpack.c.bf16 %v752, %v750
    %v755 = vpack.c.bf16 %v753, %v751
    %v756 = vpack.c.bf16 %v393, %v392
    %v757 = vpack.c.bf16 %v395, %v394
    %v758 = vpack.c.bf16 %v397, %v396
    %v759 = vpack.c.bf16 %v399, %v398
    %v760 = vpack.c.bf16 %v401, %v400
    %v761 = vpack.c.bf16 %v403, %v402
    %v762 = vpack.c.bf16 %v405, %v404
    %v763 = vpack.c.bf16 %v407, %v406
    %v764 = vpack.c.bf16 %v409, %v408
    %v765 = vpack.c.bf16 %v411, %v410
    %v766 = vpack.c.bf16 %v413, %v412
    %v767 = vpack.c.bf16 %v415, %v414
    %v768 = vpack.c.bf16 %v417, %v416
    %v769 = vpack.c.bf16 %v419, %v418
    %v770 = vpack.c.bf16 %v421, %v420
    %v771 = vpack.c.bf16 %v423, %v422
    %v773 = vperm.slane %v424, 0
    %775 = vmatpush.bf16.msra.mxu0 %v763
    %776 = vmatpush.bf16.msra.mxu0 %v762
    %777 = vmatpush.bf16.msra.mxu0 %v761
    %778 = vmatpush.bf16.msra.mxu0 %v760
    %779 = vmatpush.bf16.msra.mxu0 %v759
    %780 = vmatpush.bf16.msra.mxu0 %v758
    %781 = vmatpush.bf16.msra.mxu0 %v757
    %782 = vmatpush.bf16.msra.mxu0 %v756
    %783 = vmatmul.bf16.gmra.mxu0 %v754
    %v784 = vpop.f32.mrf.mxu0
    %v785 = vadd.f32 %v773, %v784
    %v786 = vpop.f32.mrf.mxu0
    %v787 = vadd.f32 %v773, %v786
    %788 = vdwg.mxu0
    %789 = vmatpush.bf16.msra.mxu0 %v771
    %790 = vmatpush.bf16.msra.mxu0 %v770
    %791 = vmatpush.bf16.msra.mxu0 %v769
    %792 = vmatpush.bf16.msra.mxu0 %v768
    %793 = vmatpush.bf16.msra.mxu0 %v767
    %794 = vmatpush.bf16.msra.mxu0 %v766
    %795 = vmatpush.bf16.msra.mxu0 %v765
    %796 = vmatpush.bf16.msra.mxu0 %v764
    %797 = vmatmul.bf16.gmra.mxu0 %v755
    %v798 = vpop.f32.mrf.mxu0
    %v799 = vadd.f32 %v785, %v798
    %v800 = vpop.f32.mrf.mxu0
    %v801 = vadd.f32 %v787, %v800
    %802 = vdwg.mxu0
    %v803 = vadd.f32 %v799, %v799
    %v804 = vadd.f32 %v801, %v801
    %805 = vst [vmem:[#allocation16] sm:$0xff] %v618
    %806 = vst [vmem:[#allocation16 + $0x8] sm:$0xff] %v620
    %v807 = vld [vmem:[%s37] sm:$0x1]
    %v808 = vld [vmem:[%s39] sm:$0x1]
    %v809 = vld [vmem:[#allocation7] sm:$0xff]
    %v810 = vld [vmem:[#allocation7 + $0x8] sm:$0xff]
    %v811 = vld [vmem:[#allocation7 + $0x10] sm:$0xff]
    %v812 = vld [vmem:[#allocation7 + $0x18] sm:$0xff]
    %v813 = vld [vmem:[#allocation7 + $0x20] sm:$0xff]
    %v814 = vld [vmem:[#allocation7 + $0x28] sm:$0xff]
    %v815 = vld [vmem:[#allocation7 + $0x30] sm:$0xff]
    %v816 = vld [vmem:[#allocation7 + $0x38] sm:$0xff]
    %v817 = vld [vmem:[#allocation7 + $0x40] sm:$0xff]
    %v818 = vld [vmem:[#allocation7 + $0x48] sm:$0xff]
    %v819 = vld [vmem:[#allocation7 + $0x50] sm:$0xff]
    %v820 = vld [vmem:[#allocation7 + $0x58] sm:$0xff]
    %v821 = vld [vmem:[#allocation7 + $0x60] sm:$0xff]
    %v822 = vld [vmem:[#allocation7 + $0x68] sm:$0xff]
    %v823 = vld [vmem:[#allocation7 + $0x70] sm:$0xff]
    %v824 = vld [vmem:[#allocation7 + $0x78] sm:$0xff]
    %v825 = vld [vmem:[%s43] sm:$0x1]
    %v826 = vld [vmem:[#allocation8] sm:$0xff]
    %v827 = vld [vmem:[#allocation8 + $0x8] sm:$0xff]
    %v828 = vld [vmem:[#allocation8 + $0x10] sm:$0xff]
    %v829 = vld [vmem:[#allocation8 + $0x18] sm:$0xff]
    %v830 = vld [vmem:[#allocation8 + $0x20] sm:$0xff]
    %v831 = vld [vmem:[#allocation8 + $0x28] sm:$0xff]
    %v832 = vld [vmem:[#allocation8 + $0x30] sm:$0xff]
    %v833 = vld [vmem:[#allocation8 + $0x38] sm:$0xff]
    %v834 = vld [vmem:[#allocation8 + $0x40] sm:$0xff]
    %v835 = vld [vmem:[#allocation8 + $0x48] sm:$0xff]
    %v836 = vld [vmem:[#allocation8 + $0x50] sm:$0xff]
    %v837 = vld [vmem:[#allocation8 + $0x58] sm:$0xff]
    %v838 = vld [vmem:[#allocation8 + $0x60] sm:$0xff]
    %v839 = vld [vmem:[#allocation8 + $0x68] sm:$0xff]
    %v840 = vld [vmem:[#allocation8 + $0x70] sm:$0xff]
    %v841 = vld [vmem:[#allocation8 + $0x78] sm:$0xff]
    %v842 = vld [vmem:[%s47] sm:$0x1]
    %v843 = vld [vmem:[#allocation10] sm:$0xff]
    %v844 = vld [vmem:[#allocation10 + $0x8] sm:$0xff]
    %v845 = vld [vmem:[#allocation10 + $0x10] sm:$0xff]
    %v846 = vld [vmem:[#allocation10 + $0x18] sm:$0xff]
    %v847 = vld [vmem:[#allocation10 + $0x20] sm:$0xff]
    %v848 = vld [vmem:[#allocation10 + $0x28] sm:$0xff]
    %v849 = vld [vmem:[#allocation10 + $0x30] sm:$0xff]
    %v850 = vld [vmem:[#allocation10 + $0x38] sm:$0xff]
    %v851 = vld [vmem:[#allocation10 + $0x40] sm:$0xff]
    %v852 = vld [vmem:[#allocation10 + $0x48] sm:$0xff]
    %v853 = vld [vmem:[#allocation10 + $0x50] sm:$0xff]
    %v854 = vld [vmem:[#allocation10 + $0x58] sm:$0xff]
    %v855 = vld [vmem:[#allocation10 + $0x60] sm:$0xff]
    %v856 = vld [vmem:[#allocation10 + $0x68] sm:$0xff]
    %v857 = vld [vmem:[#allocation10 + $0x70] sm:$0xff]
    %v858 = vld [vmem:[#allocation10 + $0x78] sm:$0xff]
    %v859 = vld [vmem:[%s51] sm:$0x1]
    %v860 = vld [vmem:[#allocation11] sm:$0xff]
    %v861 = vld [vmem:[#allocation11 + $0x8] sm:$0xff]
    %v862 = vld [vmem:[#allocation11 + $0x10] sm:$0xff]
    %v863 = vld [vmem:[#allocation11 + $0x18] sm:$0xff]
    %v864 = vld [vmem:[#allocation11 + $0x20] sm:$0xff]
    %v865 = vld [vmem:[#allocation11 + $0x28] sm:$0xff]
    %v866 = vld [vmem:[#allocation11 + $0x30] sm:$0xff]
    %v867 = vld [vmem:[#allocation11 + $0x38] sm:$0xff]
    %v868 = vld [vmem:[#allocation11 + $0x40] sm:$0xff]
    %v869 = vld [vmem:[#allocation11 + $0x48] sm:$0xff]
    %v870 = vld [vmem:[#allocation11 + $0x50] sm:$0xff]
    %v871 = vld [vmem:[#allocation11 + $0x58] sm:$0xff]
    %v872 = vld [vmem:[#allocation11 + $0x60] sm:$0xff]
    %v873 = vld [vmem:[#allocation11 + $0x68] sm:$0xff]
    %v874 = vld [vmem:[#allocation11 + $0x70] sm:$0xff]
    %v875 = vld [vmem:[#allocation11 + $0x78] sm:$0xff]
    %v876 = vld [vmem:[%s55] sm:$0x1]
    %v877 = vld [vmem:[%s57] sm:$0x1]
    %v878 = vld [vmem:[%s59] sm:$0x1]
    %v879 = vld [vmem:[#allocation13] sm:$0xff]
    %v880 = vld [vmem:[#allocation13 + $0x8] sm:$0xff]
    %v881 = vld [vmem:[#allocation13 + $0x10] sm:$0xff]
    %v882 = vld [vmem:[#allocation13 + $0x18] sm:$0xff]
    %v883 = vld [vmem:[#allocation13 + $0x20] sm:$0xff]
    %v884 = vld [vmem:[#allocation13 + $0x28] sm:$0xff]
    %v885 = vld [vmem:[#allocation13 + $0x30] sm:$0xff]
    %v886 = vld [vmem:[#allocation13 + $0x38] sm:$0xff]
    %v887 = vld [vmem:[#allocation13 + $0x40] sm:$0xff]
    %v888 = vld [vmem:[#allocation13 + $0x48] sm:$0xff]
    %v889 = vld [vmem:[#allocation13 + $0x50] sm:$0xff]
    %v890 = vld [vmem:[#allocation13 + $0x58] sm:$0xff]
    %v891 = vld [vmem:[#allocation13 + $0x60] sm:$0xff]
    %v892 = vld [vmem:[#allocation13 + $0x68] sm:$0xff]
    %v893 = vld [vmem:[#allocation13 + $0x70] sm:$0xff]
    %v894 = vld [vmem:[#allocation13 + $0x78] sm:$0xff]
    %v895 = vld [vmem:[#allocation13 + $0x80] sm:$0xff]
    %v896 = vld [vmem:[#allocation13 + $0x88] sm:$0xff]
    %v897 = vld [vmem:[#allocation13 + $0x90] sm:$0xff]
    %v898 = vld [vmem:[#allocation13 + $0x98] sm:$0xff]
    %v899 = vld [vmem:[#allocation13 + $0xa0] sm:$0xff]
    %v900 = vld [vmem:[#allocation13 + $0xa8] sm:$0xff]
    %v901 = vld [vmem:[#allocation13 + $0xb0] sm:$0xff]
    %v902 = vld [vmem:[#allocation13 + $0xb8] sm:$0xff]
    %v903 = vld [vmem:[#allocation13 + $0xc0] sm:$0xff]
    %v904 = vld [vmem:[#allocation13 + $0xc8] sm:$0xff]
    %v905 = vld [vmem:[#allocation13 + $0xd0] sm:$0xff]
    %v906 = vld [vmem:[#allocation13 + $0xd8] sm:$0xff]
    %v907 = vld [vmem:[#allocation13 + $0xe0] sm:$0xff]
    %v908 = vld [vmem:[#allocation13 + $0xe8] sm:$0xff]
    %v909 = vld [vmem:[#allocation13 + $0xf0] sm:$0xff]
    %v910 = vld [vmem:[#allocation13 + $0xf8] sm:$0xff]
    %v911 = vld [vmem:[%s63] sm:$0x3]
    %v912 = vld [vmem:[#allocation14] sm:$0xff]
    %v913 = vld [vmem:[#allocation14 + $0x8] sm:$0xff]
    %v914 = vld [vmem:[#allocation14 + $0x10] sm:$0xff]
    %v915 = vld [vmem:[#allocation14 + $0x18] sm:$0xff]
    %v916 = vld [vmem:[#allocation14 + $0x20] sm:$0xff]
    %v917 = vld [vmem:[#allocation14 + $0x28] sm:$0xff]
    %v918 = vld [vmem:[#allocation14 + $0x30] sm:$0xff]
    %v919 = vld [vmem:[#allocation14 + $0x38] sm:$0xff]
    %v920 = vld [vmem:[#allocation14 + $0x40] sm:$0xff]
    %v921 = vld [vmem:[#allocation14 + $0x48] sm:$0xff]
    %v922 = vld [vmem:[#allocation14 + $0x50] sm:$0xff]
    %v923 = vld [vmem:[#allocation14 + $0x58] sm:$0xff]
    %v924 = vld [vmem:[#allocation14 + $0x60] sm:$0xff]
    %v925 = vld [vmem:[#allocation14 + $0x68] sm:$0xff]
    %v926 = vld [vmem:[#allocation14 + $0x70] sm:$0xff]
    %v927 = vld [vmem:[#allocation14 + $0x78] sm:$0xff]
    %v928 = vld [vmem:[#allocation14 + $0x80] sm:$0xff]
    %v929 = vld [vmem:[#allocation14 + $0x88] sm:$0xff]
    %v930 = vld [vmem:[#allocation14 + $0x90] sm:$0xff]
    %v931 = vld [vmem:[#allocation14 + $0x98] sm:$0xff]
    %v932 = vld [vmem:[#allocation14 + $0xa0] sm:$0xff]
    %v933 = vld [vmem:[#allocation14 + $0xa8] sm:$0xff]
    %v934 = vld [vmem:[#allocation14 + $0xb0] sm:$0xff]
    %v935 = vld [vmem:[#allocation14 + $0xb8] sm:$0xff]
    %v936 = vld [vmem:[#allocation14 + $0xc0] sm:$0xff]
    %v937 = vld [vmem:[#allocation14 + $0xc8] sm:$0xff]
    %v938 = vld [vmem:[#allocation14 + $0xd0] sm:$0xff]
    %v939 = vld [vmem:[#allocation14 + $0xd8] sm:$0xff]
    %v940 = vld [vmem:[#allocation14 + $0xe0] sm:$0xff]
    %v941 = vld [vmem:[#allocation14 + $0xe8] sm:$0xff]
    %v942 = vld [vmem:[#allocation14 + $0xf0] sm:$0xff]
    %v943 = vld [vmem:[#allocation14 + $0xf8] sm:$0xff]
    %v944 = vld [vmem:[%s67] sm:$0x1]
    %945 = vadd.xlane.f32.xlu0 %v803
    %v946 = vpop.xlane.xlu0 %945
    %947 = vadd.xlane.f32.xlu0 %v804
    %v948 = vpop.xlane.xlu0 %947
    %v949 = vmul.f32 %v946, %v435
    %v950 = vmul.f32 %v948, %v435
    %v951 = vsub.f32 %v803, %v949
    %v952 = vsub.f32 %v804, %v950
    %v953 = vmul.f32 %v951, %v951
    %v954 = vmul.f32 %v952, %v952
    %955 = vadd.xlane.f32.xlu0 %v953
    %v956 = vpop.xlane.xlu0 %955
    %957 = vadd.xlane.f32.xlu0 %v954
    %v958 = vpop.xlane.xlu0 %957
    %v959 = vmul.f32 %v956, %v435
    %v960 = vmul.f32 %v958, %v435
    %v961 = vadd.f32 %v959, 1e-05
    %v962 = vadd.f32 %v960, 1e-05
    %v963 = vrsqrt.pop %v961
    %v964 = vmul.f32 %v963, %v961
    %v965 = vmul.f32 %v964, %v963
    %v966 = vmul.f32 0.5, %v965
    %v967 = vsub.f32 1.5, %v966
    %v968 = vmul.f32 %v963, %v967
    %vm969 = vweird.f32 %v961
    %vm970 = vweird.f32 %v963
    %vm971 = vmor %vm969, %vm970
    %v972 = vsel %vm971, %v963, %v968
    %v973 = vrsqrt.pop %v962
    %v974 = vmul.f32 %v973, %v962
    %v975 = vmul.f32 %v974, %v973
    %v976 = vmul.f32 0.5, %v975
    %v977 = vsub.f32 1.5, %v976
    %v978 = vmul.f32 %v973, %v977
    %vm979 = vweird.f32 %v962
    %vm980 = vweird.f32 %v973
    %vm981 = vmor %vm979, %vm980
    %v982 = vsel %vm981, %v973, %v978
    %v983 = vmul.f32 %v951, %v972
    %v984 = vmul.f32 %v952, %v982
    %v986 = vperm.slane %v807, 0
    %v988 = vmul.f32 %v983, %v986
    %v989 = vmul.f32 %v984, %v986
    %v991 = vperm.slane %v808, 0
    %v993 = vadd.f32 %v988, %v991
    %v994 = vadd.f32 %v989, %v991
    %v995 = vpack.c.bf16 %v994, %v993
    %v996 = vpack.c.bf16 %v810, %v809
    %v997 = vpack.c.bf16 %v812, %v811
    %v998 = vpack.c.bf16 %v814, %v813
    %v999 = vpack.c.bf16 %v816, %v815
    %v1000 = vpack.c.bf16 %v818, %v817
    %v1001 = vpack.c.bf16 %v820, %v819
    %v1002 = vpack.c.bf16 %v822, %v821
    %v1003 = vpack.c.bf16 %v824, %v823
    %v1005 = vperm.slane %v825, 0
    %1007 = vmatpush.bf16.msra.mxu0 %v1003
    %1008 = vmatpush.bf16.msra.mxu0 %v1002
    %1009 = vmatpush.bf16.msra.mxu0 %v1001
    %1010 = vmatpush.bf16.msra.mxu0 %v1000
    %1011 = vmatpush.bf16.msra.mxu0 %v999
    %1012 = vmatpush.bf16.msra.mxu0 %v998
    %1013 = vmatpush.bf16.msra.mxu0 %v997
    %1014 = vmatpush.bf16.msra.mxu0 %v996
    %1015 = vmatmul.bf16.gmra.mxu0 %v995
    %v1016 = vpop.f32.mrf.mxu0
    %v1017 = vadd.f32 %v1005, %v1016
    %v1018 = vpop.f32.mrf.mxu0
    %v1019 = vadd.f32 %v1005, %v1018
    %1020 = vdwg.mxu0
    %v1021 = vpack.c.bf16 %v827, %v826
    %v1022 = vpack.c.bf16 %v829, %v828
    %v1023 = vpack.c.bf16 %v831, %v830
    %v1024 = vpack.c.bf16 %v833, %v832
    %v1025 = vpack.c.bf16 %v835, %v834
    %v1026 = vpack.c.bf16 %v837, %v836
    %v1027 = vpack.c.bf16 %v839, %v838
    %v1028 = vpack.c.bf16 %v841, %v840
    %v1030 = vperm.slane %v842, 0
    %1032 = vmatpush.bf16.msra.mxu0 %v1028
    %1033 = vmatpush.bf16.msra.mxu0 %v1027
    %1034 = vmatpush.bf16.msra.mxu0 %v1026
    %1035 = vmatpush.bf16.msra.mxu0 %v1025
    %1036 = vmatpush.bf16.msra.mxu0 %v1024
    %1037 = vmatpush.bf16.msra.mxu0 %v1023
    %1038 = vmatpush.bf16.msra.mxu0 %v1022
    %1039 = vmatpush.bf16.msra.mxu0 %v1021
    %1040 = vmatmul.bf16.gmra.mxu0 %v995
    %v1041 = vpop.f32.mrf.mxu0
    %v1042 = vadd.f32 %v1030, %v1041
    %v1043 = vpop.f32.mrf.mxu0
    %v1044 = vadd.f32 %v1030, %v1043
    %1045 = vdwg.mxu0
    %v1046 = vpack.c.bf16 %v844, %v843
    %v1047 = vpack.c.bf16 %v846, %v845
    %v1048 = vpack.c.bf16 %v848, %v847
    %v1049 = vpack.c.bf16 %v850, %v849
    %v1050 = vpack.c.bf16 %v852, %v851
    %v1051 = vpack.c.bf16 %v854, %v853
    %v1052 = vpack.c.bf16 %v856, %v855
    %v1053 = vpack.c.bf16 %v858, %v857
    %v1055 = vperm.slane %v859, 0
    %1057 = vmatpush.bf16.msra.mxu0 %v1053
    %1058 = vmatpush.bf16.msra.mxu0 %v1052
    %1059 = vmatpush.bf16.msra.mxu0 %v1051
    %1060 = vmatpush.bf16.msra.mxu0 %v1050
    %1061 = vmatpush.bf16.msra.mxu0 %v1049
    %1062 = vmatpush.bf16.msra.mxu0 %v1048
    %1063 = vmatpush.bf16.msra.mxu0 %v1047
    %1064 = vmatpush.bf16.msra.mxu0 %v1046
    %1065 = vmatmul.bf16.gmra.mxu0 %v995
    %v1066 = vpop.f32.mrf.mxu0
    %v1067 = vadd.f32 %v1055, %v1066
    %v1068 = vpop.f32.mrf.mxu0
    %v1069 = vadd.f32 %v1055, %v1068
    %1070 = vdwg.mxu0
    %v1071 = vpack.c.bf16 %v1019, %v1017
    %v1072 = vpack.c.bf16 %v1044, %v1042
    %1073 = vmatpush.bf16.xpose.msra.mxu0 0
    %1074 = vmatpush.bf16.xpose.msra.mxu0 0
    %1075 = vmatpush.bf16.xpose.msra.mxu0 0
    %1076 = vmatpush.bf16.xpose.msra.mxu0 0
    %1077 = vmatpush.bf16.xpose.msra.mxu0 0
    %1078 = vmatpush.bf16.xpose.msra.mxu0 0
    %1079 = vmatpush.bf16.xpose.msra.mxu0 0
    %1080 = vmatpush.bf16.xpose.msra.mxu0 %v1072
    %1081 = vmatmul.bf16.gmra.mxu0 %v1071
    %v1082 = vpop.f32.mrf.mxu0
    %v1083 = vadd.f32 0.0, %v1082
    %v1084 = vpop.f32.mrf.mxu0
    %v1085 = vadd.f32 0.0, %v1084
    %1086 = vdwg.mxu0
    %v1087 = vmul.f32 %v1083, 0.088388346
    %v1088 = vmul.f32 %v1085, 0.088388346
    %v1089 = vsel %vm576, -1e+09, %v1087
    %v1090 = vsel %vm577, -1e+09, %v1088
    %v1091 = vsel %vm580, %v1089, -inf
    %1092 = vmax.xlane.f32.xlu0 %v1091
    %v1093 = vpop.xlane.xlu0 %1092
    %v1094 = vsel %vm580, %v1090, -inf
    %1095 = vmax.xlane.f32.xlu0 %v1094
    %v1096 = vpop.xlane.xlu0 %1095
    %v1097 = vsub.f32 %v1089, %v1093
    %v1098 = vsub.f32 %v1090, %v1096
    %v1099 = vmul.f32 %v1097, 1.442695
    %v1100 = vpow.pop %v1099
    %v1101 = vmul.f32 %v1098, 1.442695
    %v1102 = vpow.pop %v1101
    %v1103 = vsel %vm580, %v1100, 0.0
    %1104 = vadd.xlane.f32.xlu0 %v1103
    %v1105 = vpop.xlane.xlu0 %1104
    %v1106 = vsel %vm580, %v1102, 0.0
    %1107 = vadd.xlane.f32.xlu0 %v1106
    %v1108 = vpop.xlane.xlu0 %1107
    %v1109 = vrcp.pop %v1105
    %v1110 = vrcp.pop %v1108
    %v1111 = vmul.f32 %v1100, %v1109
    %v1112 = vmul.f32 %v1102, %v1110
    %v1113 = vpack.c.bf16 %v1112, %v1111
    %v1114 = vpack.c.bf16 %v1069, %v1067
    %v1116 = vsel %vm580, %v1113, 0
    %1118 = vmatpush.bf16.msra.mxu0 0
    %1119 = vmatpush.bf16.msra.mxu0 0
    %1120 = vmatpush.bf16.msra.mxu0 0
    %1121 = vmatpush.bf16.msra.mxu0 0
    %1122 = vmatpush.bf16.msra.mxu0 0
    %1123 = vmatpush.bf16.msra.mxu0 0
    %1124 = vmatpush.bf16.msra.mxu0 0
    %1125 = vmatpush.bf16.msra.mxu0 %v1114
    %1126 = vmatmul.bf16.gmra.mxu0 %v1116
    %v1127 = vpop.f32.mrf.mxu0
    %v1128 = vadd.f32 0.0, %v1127
    %v1129 = vpop.f32.mrf.mxu0
    %v1130 = vadd.f32 0.0, %v1129
    %1131 = vdwg.mxu0
    %v1132 = vpack.c.bf16 %v1130, %v1128
    %v1133 = vpack.c.bf16 %v861, %v860
    %v1134 = vpack.c.bf16 %v863, %v862
    %v1135 = vpack.c.bf16 %v865, %v864
    %v1136 = vpack.c.bf16 %v867, %v866
    %v1137 = vpack.c.bf16 %v869, %v868
    %v1138 = vpack.c.bf16 %v871, %v870
    %v1139 = vpack.c.bf16 %v873, %v872
    %v1140 = vpack.c.bf16 %v875, %v874
    %v1142 = vperm.slane %v876, 0
    %1144 = vmatpush.bf16.msra.mxu0 %v1140
    %1145 = vmatpush.bf16.msra.mxu0 %v1139
    %1146 = vmatpush.bf16.msra.mxu0 %v1138
    %1147 = vmatpush.bf16.msra.mxu0 %v1137
    %1148 = vmatpush.bf16.msra.mxu0 %v1136
    %1149 = vmatpush.bf16.msra.mxu0 %v1135
    %1150 = vmatpush.bf16.msra.mxu0 %v1134
    %1151 = vmatpush.bf16.msra.mxu0 %v1133
    %1152 = vmatmul.bf16.gmra.mxu0 %v1132
    %v1153 = vpop.f32.mrf.mxu0
    %v1154 = vadd.f32 %v1142, %v1153
    %v1155 = vpop.f32.mrf.mxu0
    %v1156 = vadd.f32 %v1142, %v1155
    %1157 = vdwg.mxu0
    %v1158 = vadd.f32 %v1154, %v1154
    %v1159 = vadd.f32 %v1156, %v1156
    %1160 = vadd.xlane.f32.xlu0 %v1158
    %v1161 = vpop.xlane.xlu0 %1160
    %1162 = vadd.xlane.f32.xlu0 %v1159
    %v1163 = vpop.xlane.xlu0 %1162
    %v1164 = vmul.f32 %v1161, %v435
    %v1165 = vmul.f32 %v1163, %v435
    %v1166 = vsub.f32 %v1158, %v1164
    %v1167 = vsub.f32 %v1159, %v1165
    %v1168 = vmul.f32 %v1166, %v1166
    %v1169 = vmul.f32 %v1167, %v1167
    %1170 = vadd.xlane.f32.xlu0 %v1168
    %v1171 = vpop.xlane.xlu0 %1170
    %1172 = vadd.xlane.f32.xlu0 %v1169
    %v1173 = vpop.xlane.xlu0 %1172
    %v1174 = vmul.f32 %v1171, %v435
    %v1175 = vmul.f32 %v1173, %v435
    %v1176 = vadd.f32 %v1174, 1e-05
    %v1177 = vadd.f32 %v1175, 1e-05
    %v1178 = vrsqrt.pop %v1176
    %v1179 = vmul.f32 %v1178, %v1176
    %v1180 = vmul.f32 %v1179, %v1178
    %v1181 = vmul.f32 0.5, %v1180
    %v1182 = vsub.f32 1.5, %v1181
    %v1183 = vmul.f32 %v1178, %v1182
    %vm1184 = vweird.f32 %v1176
    %vm1185 = vweird.f32 %v1178
    %vm1186 = vmor %vm1184, %vm1185
    %v1187 = vsel %vm1186, %v1178, %v1183
    %v1188 = vrsqrt.pop %v1177
    %v1189 = vmul.f32 %v1188, %v1177
    %v1190 = vmul.f32 %v1189, %v1188
    %v1191 = vmul.f32 0.5, %v1190
    %v1192 = vsub.f32 1.5, %v1191
    %v1193 = vmul.f32 %v1188, %v1192
    %vm1194 = vweird.f32 %v1177
    %vm1195 = vweird.f32 %v1188
    %vm1196 = vmor %vm1194, %vm1195
    %v1197 = vsel %vm1196, %v1188, %v1193
    %v1198 = vmul.f32 %v1166, %v1187
    %v1199 = vmul.f32 %v1167, %v1197
    %v1201 = vperm.slane %v877, 0
    %v1203 = vmul.f32 %v1198, %v1201
    %v1204 = vmul.f32 %v1199, %v1201
    %v1206 = vperm.slane %v878, 0
    %v1208 = vadd.f32 %v1203, %v1206
    %v1209 = vadd.f32 %v1204, %v1206
    %v1210 = vpack.c.bf16 %v1209, %v1208
    %v1211 = vpack.c.bf16 %v881, %v879
    %v1212 = vpack.c.bf16 %v882, %v880
    %v1213 = vpack.c.bf16 %v885, %v883
    %v1214 = vpack.c.bf16 %v886, %v884
    %v1215 = vpack.c.bf16 %v889, %v887
    %v1216 = vpack.c.bf16 %v890, %v888
    %v1217 = vpack.c.bf16 %v893, %v891
    %v1218 = vpack.c.bf16 %v894, %v892
    %v1219 = vpack.c.bf16 %v897, %v895
    %v1220 = vpack.c.bf16 %v898, %v896
    %v1221 = vpack.c.bf16 %v901, %v899
    %v1222 = vpack.c.bf16 %v902, %v900
    %v1223 = vpack.c.bf16 %v905, %v903
    %v1224 = vpack.c.bf16 %v906, %v904
    %v1225 = vpack.c.bf16 %v909, %v907
    %v1226 = vpack.c.bf16 %v910, %v908
    %v1228 = vperm.slane %v911, 0
    %v1229 = vperm.slane %v911, 1
    %1232 = vmatpush.bf16.msra.mxu0 %v1225
    %1233 = vmatpush.bf16.msra.mxu0 %v1223
    %1234 = vmatpush.bf16.msra.mxu0 %v1221
    %1235 = vmatpush.bf16.msra.mxu0 %v1219
    %1236 = vmatpush.bf16.msra.mxu0 %v1217
    %1237 = vmatpush.bf16.msra.mxu0 %v1215
    %1238 = vmatpush.bf16.msra.mxu0 %v1213
    %1239 = vmatpush.bf16.msra.mxu0 %v1211
    %1240 = vmatmul.bf16.gmra.mxu0 %v1210
    %v1241 = vpop.f32.mrf.mxu0
    %v1242 = vadd.f32 %v1228, %v1241
    %v1243 = vpop.f32.mrf.mxu0
    %v1244 = vadd.f32 %v1228, %v1243
    %1245 = vdwg.mxu0
    %1246 = vmatpush.bf16.msra.mxu0 %v1226
    %1247 = vmatpush.bf16.msra.mxu0 %v1224
    %1248 = vmatpush.bf16.msra.mxu0 %v1222
    %1249 = vmatpush.bf16.msra.mxu0 %v1220
    %1250 = vmatpush.bf16.msra.mxu0 %v1218
    %1251 = vmatpush.bf16.msra.mxu0 %v1216
    %1252 = vmatpush.bf16.msra.mxu0 %v1214
    %1253 = vmatpush.bf16.msra.mxu0 %v1212
    %1254 = vmatmul.bf16.gmra.mxu0 %v1210
    %v1255 = vpop.f32.mrf.mxu0
    %v1256 = vadd.f32 %v1229, %v1255
    %v1257 = vpop.f32.mrf.mxu0
    %v1258 = vadd.f32 %v1229, %v1257
    %1259 = vdwg.mxu0
    %v1260 = vmax.f32 %v1242, 0.0
    %v1261 = vmax.f32 %v1256, 0.0
    %v1262 = vmax.f32 %v1244, 0.0
    %v1263 = vmax.f32 %v1258, 0.0
    %v1264 = vpack.c.bf16 %v1262, %v1260
    %v1265 = vpack.c.bf16 %v1263, %v1261
    %v1266 = vpack.c.bf16 %v913, %v912
    %v1267 = vpack.c.bf16 %v915, %v914
    %v1268 = vpack.c.bf16 %v917, %v916
    %v1269 = vpack.c.bf16 %v919, %v918
    %v1270 = vpack.c.bf16 %v921, %v920
    %v1271 = vpack.c.bf16 %v923, %v922
    %v1272 = vpack.c.bf16 %v925, %v924
    %v1273 = vpack.c.bf16 %v927, %v926
    %v1274 = vpack.c.bf16 %v929, %v928
    %v1275 = vpack.c.bf16 %v931, %v930
    %v1276 = vpack.c.bf16 %v933, %v932
    %v1277 = vpack.c.bf16 %v935, %v934
    %v1278 = vpack.c.bf16 %v937, %v936
    %v1279 = vpack.c.bf16 %v939, %v938
    %v1280 = vpack.c.bf16 %v941, %v940
    %v1281 = vpack.c.bf16 %v943, %v942
    %v1283 = vperm.slane %v944, 0
    %1285 = vmatpush.bf16.msra.mxu0 %v1273
    %1286 = vmatpush.bf16.msra.mxu0 %v1272
    %1287 = vmatpush.bf16.msra.mxu0 %v1271
    %1288 = vmatpush.bf16.msra.mxu0 %v1270
    %1289 = vmatpush.bf16.msra.mxu0 %v1269
    %1290 = vmatpush.bf16.msra.mxu0 %v1268
    %1291 = vmatpush.bf16.msra.mxu0 %v1267
    %1292 = vmatpush.bf16.msra.mxu0 %v1266
    %1293 = vmatmul.bf16.gmra.mxu0 %v1264
    %v1294 = vpop.f32.mrf.mxu0
    %v1295 = vadd.f32 %v1283, %v1294
    %v1296 = vpop.f32.mrf.mxu0
    %v1297 = vadd.f32 %v1283, %v1296
    %1298 = vdwg.mxu0
    %1299 = vmatpush.bf16.msra.mxu0 %v1281
    %1300 = vmatpush.bf16.msra.mxu0 %v1280
    %1301 = vmatpush.bf16.msra.mxu0 %v1279
    %1302 = vmatpush.bf16.msra.mxu0 %v1278
    %1303 = vmatpush.bf16.msra.mxu0 %v1277
    %1304 = vmatpush.bf16.msra.mxu0 %v1276
    %1305 = vmatpush.bf16.msra.mxu0 %v1275
    %1306 = vmatpush.bf16.msra.mxu0 %v1274
    %1307 = vmatmul.bf16.gmra.mxu0 %v1265
    %v1308 = vpop.f32.mrf.mxu0
    %v1309 = vadd.f32 %v1295, %v1308
    %v1310 = vpop.f32.mrf.mxu0
    %v1311 = vadd.f32 %v1297, %v1310
    %1312 = vdwg.mxu0
    %v1313 = vadd.f32 %v1309, %v1309
    %v1314 = vadd.f32 %v1311, %v1311
    %1315 = vst [vmem:[#allocation17] sm:$0xff] %v1128
    %1316 = vst [vmem:[#allocation17 + $0x8] sm:$0xff] %v1130
    %v1317 = vld [vmem:[%s69] sm:$0xff]
    %v1318 = vld [vmem:[%s69 + $0x8] sm:$0xff]
    %v1319 = vld [vmem:[%s69 + $0x10] sm:$0xff]
    %v1320 = vld [vmem:[%s69 + $0x18] sm:$0xff]
    %v1321 = vld [vmem:[%s69 + $0x20] sm:$0xff]
    %v1322 = vld [vmem:[%s69 + $0x28] sm:$0xff]
    %v1323 = vld [vmem:[%s69 + $0x30] sm:$0xff]
    %v1324 = vld [vmem:[%s69 + $0x38] sm:$0xff]
    %v1325 = vld [vmem:[%s69 + $0x40] sm:$0xff]
    %v1326 = vld [vmem:[%s69 + $0x48] sm:$0xff]
    %v1327 = vld [vmem:[%s69 + $0x50] sm:$0xff]
    %v1328 = vld [vmem:[%s69 + $0x58] sm:$0xff]
    %v1329 = vld [vmem:[%s69 + $0x60] sm:$0xff]
    %v1330 = vld [vmem:[%s69 + $0x68] sm:$0xff]
    %v1331 = vld [vmem:[%s69 + $0x70] sm:$0xff]
    %v1332 = vld [vmem:[%s69 + $0x78] sm:$0xff]
    %v1333 = vld [vmem:[%s71] sm:$0x1]
    %v1334 = vpack.c.bf16 %v1314, %v1313
    %v1335 = vpack.c.bf16 %v1318, %v1317
    %v1336 = vpack.c.bf16 %v1320, %v1319
    %v1337 = vpack.c.bf16 %v1322, %v1321
    %v1338 = vpack.c.bf16 %v1324, %v1323
    %v1339 = vpack.c.bf16 %v1326, %v1325
    %v1340 = vpack.c.bf16 %v1328, %v1327
    %v1341 = vpack.c.bf16 %v1330, %v1329
    %v1342 = vpack.c.bf16 %v1332, %v1331
    %v1344 = vperm.slane %v1333, 0
    %1346 = vmatpush.bf16.msra.mxu0 %v1342
    %1347 = vmatpush.bf16.msra.mxu0 %v1341
    %1348 = vmatpush.bf16.msra.mxu0 %v1340
    %1349 = vmatpush.bf16.msra.mxu0 %v1339
    %1350 = vmatpush.bf16.msra.mxu0 %v1338
    %1351 = vmatpush.bf16.msra.mxu0 %v1337
    %1352 = vmatpush.bf16.msra.mxu0 %v1336
    %1353 = vmatpush.bf16.msra.mxu0 %v1335
    %1354 = vmatmul.bf16.gmra.mxu0 %v1334
    %v1355 = vpop.f32.mrf.mxu0
    %v1356 = vadd.f32 %v1344, %v1355
    %v1357 = vpop.f32.mrf.mxu0
    %v1358 = vadd.f32 %v1344, %v1357
    %1359 = vdwg.mxu0
    %1360 = vst [vmem:[%s77] sm:$0xff] %v1356
    %1361 = vst [vmem:[%s77 + $0x8] sm:$0xff] %v1358
    // Predicated region
    $region178: #{transformer_classification_forward.1} parent=1 // pred_check
      _
    $region179: #{transformer_classification_forward.1} parent=1 // pred_check_branch
      %1363 = sbr.rel (0) target = $region181
    $region180: #{transformer_classification_forward.1} parent=1 // pred_region
      %1365 = vsyncadd [#allocation4], 0
      %s1366 = sshll.u32 [#allocation16], 4
      %s1367 = int_to_ptr.vmem [resolvable:$true] %s1366
      %s1368 = sshll.u32 %s73, 4
      %s1369 = int_to_ptr.hbm [resolvable:$true] %s1368
      %1374 = dma.vmem_to_hbm [thread:$0]  %s1367, 256, %s1369, [#allocation4], 128, 128, 8
    $region181: #{transformer_classification_forward.1} parent=1 // pred_fallthru
      _
    // Predicated region
    $region182: #{transformer_classification_forward.1} parent=1 // pred_check
      _
    $region183: #{transformer_classification_forward.1} parent=1 // pred_check_branch
      %1376 = sbr.rel (0) target = $region185
    $region184: #{transformer_classification_forward.1} parent=1 // pred_region
      %1378 = vsyncadd [#allocation18], 0
      %s1379 = sshll.u32 [#allocation17], 4
      %s1380 = int_to_ptr.vmem [resolvable:$true] %s1379
      %s1381 = sshll.u32 %s75, 4
      %s1382 = int_to_ptr.hbm [resolvable:$true] %s1381
      %1387 = dma.vmem_to_hbm [thread:$0]  %s1380, 256, %s1382, [#allocation18], 128, 128, 8
    $region185: #{transformer_classification_forward.1} parent=1 // pred_fallthru
      _
    // Predicated region
    $region186: #{transformer_classification_forward.1} parent=1 // pred_check
      _
    $region187: #{transformer_classification_forward.1} parent=1 // pred_check_branch
      %1389 = sbr.rel (0) target = $region189
    $region188: #{transformer_classification_forward.1} parent=1 // pred_region
      _
    $region189: #{transformer_classification_forward.1} parent=1 // pred_fallthru
      _
    // Predicated region
    $region190: #{transformer_classification_forward.1} parent=1 // pred_check
      _
    $region191: #{transformer_classification_forward.1} parent=1 // pred_check_branch
      %1391 = sbr.rel (0) target = $region193
    $region192: #{transformer_classification_forward.1} parent=1 // pred_region
      %1393 = dma.done [#allocation4], 256
    $region193: #{transformer_classification_forward.1} parent=1 // pred_fallthru
      _
    // Predicated region
    $region194: #{transformer_classification_forward.1} parent=1 // pred_check
      _
    $region195: #{transformer_classification_forward.1} parent=1 // pred_check_branch
      %1395 = sbr.rel (0) target = $region197
    $region196: #{transformer_classification_forward.1} parent=1 // pred_region
      %1397 = dma.done [#allocation18], 256
    $region197: #{transformer_classification_forward.1} parent=1 // pred_fallthru
      _
    // Predicated region
    $region198: #{transformer_classification_forward.1} parent=1 // pred_check
      _
    $region199: #{transformer_classification_forward.1} parent=1 // pred_check_branch
      %1399 = sbr.rel (0) target = $region201
    $region200: #{transformer_classification_forward.1} parent=1 // pred_region
      _
    $region201: #{transformer_classification_forward.1} parent=1 // pred_fallthru
      _
    %1400 = vsyncpa [#allocation3], 1
    %1401 = vsyncpa [#allocation6], 1
    %1402 = vsyncpa [#allocation9], 1
    %1403 = vsyncpa [#allocation12], 1
    %1404 = vsyncpa [#allocation15], 1
    %1405 = vsyncpa [#allocation4], 1
    %1406 = vsyncpa [#allocation18], 1

</llo_original>
